<compile_context>
chip_gen: v7x
topology: tpu7x:2x2x1
jax: 0.10.0
libtpu: 0.0.40
codegen_flags: <defaults>
</compile_context>

<pallas_src>
import jax
import jax.numpy as jnp
from jax.experimental import pallas as pl
from jax.experimental.pallas import tpu as pltpu

# ----------------------------- problem sizes --------------------------------
B = 2            # batch
CIN = 4          # num_in_filters
COUT = 32        # num_out_filters
D, H, W = 8, 16, 16   # spatial depth / height / width
BN_EPS = 1e-5    # nn.BatchNorm3d default eps
TILE_M = 128     # rows of (B*D*H) per grid step


# ------------------------------- the kernel ----------------------------------
def conv_bn_relu_kernel(lhs_ref, w_ref, shift_ref, o_ref):
    """One MXU matmul + folded-BN shift + ReLU.

    lhs_ref   : (TILE_M, 9*W*Cin)   im2col'd activations (taps concatenated in K)
    w_ref     : (9*W*Cin, W*Cout)   BN-scaled W-axis block-Toeplitz weights
    shift_ref : (1, W*Cout)         folded BN shift (+ conv bias), W-tiled
    o_ref     : (TILE_M, W*Cout)    lane-dense output tile
    """
    # Single matmul: K-accumulation happens inside the MXU pass, so there is
    # no VMEM accumulator read-modify-write traffic at all.
    # (bf16 lhs/w with preferred_element_type=f32 is a further v6e/v7x option;
    #  kept f32 here to preserve the 1e-3 correctness tolerance.)
    acc = jnp.dot(lhs_ref[...], w_ref[...], preferred_element_type=jnp.float32)
    o_ref[...] = jnp.maximum(acc + shift_ref[...], 0.0).astype(o_ref.dtype)


# ------------------- one-time parameter fold (setup time) --------------------
def prepare_conv_bn_params(params, width=W):
    """Fold conv weight + bias + BatchNorm running stats into a BN-scaled
    W-axis block-Toeplitz matrix and a per-lane shift.  Weights are static at
    inference, so this runs ONCE and is NOT part of the per-call path."""
    cin, cout = params["w"].shape[-2], params["w"].shape[-1]
    w9 = params["w"].reshape(9, 3, cin, cout)                 # (tap, kw, ci, co)

    # T[t*W*Cin + wi*Cin + ci, wo*Cout + co] = w[kd, kh, wi-wo+1, ci, co]
    # if 0 <= wi-wo+1 < 3 else 0.  The boundary masking implements the W-axis
    # zero padding, so the activations never need a lane-axis pad.
    wi = jnp.arange(width)[:, None]                           # input w
    wo = jnp.arange(width)[None, :]                           # output w
    kw = wi - wo + 1                                          # conv padding = 1
    valid = (kw >= 0) & (kw <= 2)
    g = w9[:, jnp.clip(kw, 0, 2)]                             # (9, W, W, ci, co)
    g = jnp.where(valid[None, :, :, None, None], g, 0.0)
    t = jnp.transpose(g, (0, 1, 3, 2, 4)).reshape(9 * width * cin, width * cout)

    inv_std = jax.lax.rsqrt(params["bn_var"] + BN_EPS)
    scale = params["bn_gamma"] * inv_std                      # (Cout,)
    shift = params["bn_beta"] + (params["b"] - params["bn_mean"]) * scale
    t = t * jnp.tile(scale, width)[None, :]                   # fold BN scale into weights
    shift_t = jnp.tile(shift, width).reshape(1, width * cout)
    return t, shift_t


# ------------------------------ forward passes --------------------------------
@jax.jit
def conv3d_bn_relu_ndhwc(x_ndhwc, t, shift_t):
    """Channels-last forward: (B, D, H, W, Cin) -> (B, D, H, W, Cout)."""
    b, d, h, w, cin = x_ndhwc.shape
    cout = shift_t.shape[-1] // w
    m, k, n = b * d * h, 9 * w * cin, w * cout
    assert m % TILE_M == 0

    # D/H zero pad + (kd, kh) tap im2col.  No W/lane padding (handled by the
    # Toeplitz weights); XLA fuses pad + slices + concat into one fusion.
    xr = x_ndhwc.reshape(b, d, h, w * cin)
    xp = jnp.pad(xr, ((0, 0), (1, 1), (1, 1), (0, 0)))        # (B, D+2, H+2, W*Cin)
    lhs = jnp.concatenate(
        [xp[:, kd:kd + d, kh:kh + h, :] for kd in range(3) for kh in range(3)],
        axis=-1).reshape(m, k)                                # (256, 576)

    out_flat = pl.pallas_call(
        conv_bn_relu_kernel,
        out_shape=jax.ShapeDtypeStruct((m, n), jnp.float32),
        grid=(m // TILE_M,),
        in_specs=[
            pl.BlockSpec((TILE_M, k), lambda i: (i, 0)),
            pl.BlockSpec((k, n), lambda i: (0, 0)),           # resident across tiles
            pl.BlockSpec((1, n), lambda i: (0, 0)),
        ],
        out_specs=pl.BlockSpec((TILE_M, n), lambda i: (i, 0)),
        compiler_params=pltpu.CompilerParams(
            dimension_semantics=("parallel",)),               # v7x: one tile per TC
        cost_estimate=pl.CostEstimate(
            flops=2 * m * k * n,
            transcendentals=0,
            bytes_accessed=4 * (m * k + k * n + n + m * n)),
    )(lhs, t, shift_t)

    return out_flat.reshape(b, d, h, w, cout)


@jax.jit
def conv3d_bn_relu_ncdhw(x, t, shift_t):
    """NCDHW wrapper matching the PyTorch module interface.  The two
    transposes are pure layout glue; keeping the model channels-last (NDHWC)
    end-to-end removes them entirely."""
    x_ndhwc = jnp.transpose(x, (0, 2, 3, 4, 1))               # (B, D, H, W, Cin)
    y = conv3d_bn_relu_ndhwc(x_ndhwc, t, shift_t)
    return jnp.transpose(y, (0, 4, 1, 2, 3))                  # (B, Cout, D, H, W)


# ----------------------------- pure-JAX reference ----------------------------
def conv3d_bn_relu_reference(x, params):
    cout = params["w"].shape[-1]
    w_oidhw = jnp.transpose(params["w"], (4, 3, 0, 1, 2))     # (Cout, Cin, 3, 3, 3)
    y = jax.lax.conv_general_dilated(
        x, w_oidhw, window_strides=(1, 1, 1),
        padding=((1, 1), (1, 1), (1, 1)),
        dimension_numbers=("NCDHW", "OIDHW", "NCDHW"))
    y = y + params["b"].reshape(1, cout, 1, 1, 1)
    inv_std = jax.lax.rsqrt(params["bn_var"] + BN_EPS).reshape(1, cout, 1, 1, 1)
    y = (y - params["bn_mean"].reshape(1, cout, 1, 1, 1)) * inv_std
    y = y * params["bn_gamma"].reshape(1, cout, 1, 1, 1) \
        + params["bn_beta"].reshape(1, cout, 1, 1, 1)
    return jnp.maximum(y, 0.0)


# ------------------------------------ main -----------------------------------
if __name__ == "__main__":
    key = jax.random.PRNGKey(0)
    kx, kw_, kb_, kg, kbe, km, kv = jax.random.split(key, 7)

    x = jax.random.normal(kx, (B, CIN, D, H, W), dtype=jnp.float32)

    params = {
        # conv weight stored as (kd, kh, kw, Cin, Cout)
        "w": jax.random.normal(kw_, (3, 3, 3, CIN, COUT), jnp.float32)
             / jnp.sqrt(27.0 * CIN),
        "b": 0.1 * jax.random.normal(kb_, (COUT,), jnp.float32),
        "bn_gamma": 1.0 + 0.1 * jax.random.normal(kg, (COUT,), jnp.float32),
        "bn_beta": 0.1 * jax.random.normal(kbe, (COUT,), jnp.float32),
        "bn_mean": 0.1 * jax.random.normal(km, (COUT,), jnp.float32),
        "bn_var": jnp.abs(jax.random.normal(kv, (COUT,), jnp.float32)) + 0.5,
    }

    # One-time parameter fold (hoisted out of the per-call forward path).
    t, shift_t = prepare_conv_bn_params(params)
    t = jax.block_until_ready(t)
    shift_t = jax.block_until_ready(shift_t)

    out = jax.block_until_ready(conv3d_bn_relu_ncdhw(x, t, shift_t))
    ref = jax.block_until_ready(conv3d_bn_relu_reference(x, params))

    assert out.shape == (B, COUT, D, H, W), out.shape
    max_err = float(jnp.max(jnp.abs(out - ref)))
    assert max_err < 1e-3, f"mismatch vs reference: {max_err}"
    print("KERNEL_OK")
</pallas_src>

<mosaic_0001>
module attributes {stable_mosaic.version = 11 : i64} {
  func.func @conv_bn_relu_kernel(%arg0: i32, %arg1: memref<128x576xf32, #tpu.memory_space<vmem>>, %arg2: memref<576x512xf32, #tpu.memory_space<vmem>>, %arg3: memref<1x512xf32, #tpu.memory_space<vmem>>, %arg4: memref<128x512xf32, #tpu.memory_space<vmem>>) attributes {dimension_semantics = [#tpu.dimension_semantics<parallel>], iteration_bounds = array<i64: 2>, scalar_prefetch = 0 : i64, scratch_operands = 0 : i64, tpu.core_type = #tpu.core_type<tc>, window_params = [{transform_indices = @transform_0, window_bounds = array<i64: 128, 576>}, {pipeline_mode = #tpu.pipeline_mode<synchronous>, transform_indices = @transform_1, window_bounds = array<i64: 576, 512>}, {pipeline_mode = #tpu.pipeline_mode<synchronous>, transform_indices = @transform_2, window_bounds = array<i64: 1, 512>}, {transform_indices = @transform_3, window_bounds = array<i64: 128, 512>}]} {
    %c0 = arith.constant 0 : index
    %c0_0 = arith.constant 0 : index
    %0 = vector.load %arg1[%c0, %c0_0] : memref<128x576xf32, #tpu.memory_space<vmem>>, vector<128x576xf32>
    %c0_1 = arith.constant 0 : index
    %c0_2 = arith.constant 0 : index
    %1 = vector.load %arg2[%c0_1, %c0_2] : memref<576x512xf32, #tpu.memory_space<vmem>>, vector<576x512xf32>
    %cst = arith.constant dense<0.000000e+00> : vector<128x512xf32>
    %2 = tpu.matmul %0, %1, %cst {dimension_numbers = #tpu.dot_dimension_numbers<[1], [0], [0], [1], [0, 0, 1, 1], [], []>} : vector<128x576xf32>, vector<576x512xf32>, vector<128x512xf32> -> vector<128x512xf32>
    %c0_3 = arith.constant 0 : index
    %c0_4 = arith.constant 0 : index
    %3 = vector.load %arg3[%c0_3, %c0_4] : memref<1x512xf32, #tpu.memory_space<vmem>>, vector<1x512xf32>
    %4 = vector.broadcast %3 : vector<1x512xf32> to vector<128x512xf32>
    %5 = arith.addf %2, %4 : vector<128x512xf32>
    %cst_5 = arith.constant 0.000000e+00 : f32
    %6 = vector.broadcast %cst_5 : f32 to vector<128x512xf32>
    %7 = arith.maximumf %5, %6 : vector<128x512xf32>
    %c0_6 = arith.constant 0 : index
    %c0_7 = arith.constant 0 : index
    %8 = vector.load %arg4[%c0_6, %c0_7] : memref<128x512xf32, #tpu.memory_space<vmem>>, vector<128x512xf32>
    tpu.vector_store %arg4[%c0_6, %c0_7], %7 {strides = array<i32>} : memref<128x512xf32, #tpu.memory_space<vmem>>, vector<128x512xf32>,
    return
  }
  func.func @transform_0(%arg0: i32) -> (i32, i32) {
    %c0_i32 = arith.constant 0 : i32
    %c0_i32_0 = arith.constant 0 : i32
    return %arg0, %c0_i32 : i32, i32
  }
  func.func @transform_1(%arg0: i32) -> (i32, i32) {
    %c0_i32 = arith.constant 0 : i32
    %c0_i32_0 = arith.constant 0 : i32
    %c0_i32_1 = arith.constant 0 : i32
    return %c0_i32, %c0_i32_0 : i32, i32
  }
  func.func @transform_2(%arg0: i32) -> (i32, i32) {
    %c0_i32 = arith.constant 0 : i32
    %c0_i32_0 = arith.constant 0 : i32
    %c0_i32_1 = arith.constant 0 : i32
    return %c0_i32, %c0_i32_0 : i32, i32
  }
  func.func @transform_3(%arg0: i32) -> (i32, i32) {
    %c0_i32 = arith.constant 0 : i32
    %c0_i32_0 = arith.constant 0 : i32
    return %arg0, %c0_i32 : i32, i32
  }
}

</mosaic_0001>

<llo_original>
// kernel: conv3d_bn_relu_ndhwc.1
$region0: #{conv3d_bn_relu_ndhwc.1}
  #allocation0 [shape = 'u32[]', space=smem, size = 0x4, offset = 0x4, fixed_abs, tag = 'smem constant byte address 0x4 - core index']
  #allocation1 [shape = 'u32[144,128]{1,0:T(1,128)}', space=vmem, size = 0x12000, scoped, tag = 'internal scratch']
  %s0 = inlined_call_operand.vmem [shape: f32[256,576], index: 0, kind: input, shape index: {}]
  %s1 = inlined_call_operand.vmem [shape: f32[576,512], index: 1, kind: input, shape index: {}]
  %s2 = inlined_call_operand.vmem [shape: f32[1,512], index: 2, kind: input, shape index: {}]
  %s3 = inlined_call_operand.vmem [shape: f32[256,512], index: 3, kind: output, shape index: {}]
  %s4 = sld [smem:[#allocation0]]
  $region45: #{conv3d_bn_relu_ndhwc.1} parent=0
    _
  %s6 = ssub.s32 1, %s4
  %s7 = scalar_select 0, %s6, %s4
  loop: start=0, step=1, limit=4
  $region2: #{conv3d_bn_relu_ndhwc.1} parent=0 // loop_pre_header
    _
  $region3: #{conv3d_bn_relu_ndhwc.1} parent=0 // loop_header
    %s9 = sphi 0, %s13
    %p10 = scmp.ge.s32.totalorder %s9, 4
    %s19 = sphi 0, %s21
    %s22 = sphi 0, %s19
    %s23 = sphi 0, %s22
    %s39 = sphi 0, %s23
    %s43 = sphi 0, %s43
    %s45 = sphi 0, %s43
    %s46 = sphi 0, %s45
    %s60 = sphi 0, %s46
    %s64 = sphi 0, %s64
    %s66 = sphi 0, %s64
    %s67 = sphi 0, %s66
    %s81 = sphi 0, %s67
    %s87 = sphi 0, %s89
    %s90 = sphi 0, %s87
    %s91 = sphi 0, %s90
    %s107 = sphi 0, %s91
  $region4: #{conv3d_bn_relu_ndhwc.1} parent=0 // loop_header_branch
    %12 = sbr.rel (%p10) target = $region8
  $region5: #{conv3d_bn_relu_ndhwc.1} parent=0 // loop_body
    %s14 = ssub.s32 %s9, 1
    %s15 = ssub.s32 %s9, 2
    %s16 = sadd.s32 %s9, 1
    %s17 = ssub.s32 %s9, %s16
    %p18 = scmp.eq.s32.totalorder %s17, 0
    %s20 = sadd.s32 %s19, 1
    %s21 = scalar_select %p18, %s19, %s20
    %p24 = pneg %p18
    %p25 = scmp.eq.s32.totalorder %s9, 1
    %p26 = por %p24, %p25
    %p27 = scmp.ne.s32.totalorder %s19, %s22
    %p28 = scmp.eq.s32.totalorder %s9, 0
    %p29 = por %p27, %p28
    %p30 = scmp.ne.s32.totalorder %s19, %s22
    %p31 = scmp.eq.s32.totalorder %s14, 1
    %p32 = por %p30, %p31
    %p33 = scmp.ne.s32.totalorder %s22, %s23
    %p34 = scmp.eq.s32.totalorder %s14, 0
    %p35 = por %p33, %p34
    %p36 = scmp.ne.s32.totalorder %s22, %s23
    %p37 = scmp.eq.s32.totalorder %s15, 1
    %p38 = por %p36, %p37
    %p40 = scmp.ne.s32.totalorder %s23, %s39
    %p41 = scmp.eq.s32.totalorder %s15, 0
    %p42 = por %p40, %p41
    %s44 = sadd.s32 %s43, 1
    %p47 = scmp.eq.s32.totalorder %s9, 1
    %p48 = scmp.ne.s32.totalorder %s43, %s45
    %p49 = scmp.eq.s32.totalorder %s9, 0
    %p50 = por %p48, %p49
    %p51 = scmp.ne.s32.totalorder %s43, %s45
    %p52 = scmp.eq.s32.totalorder %s14, 1
    %p53 = por %p51, %p52
    %p54 = scmp.ne.s32.totalorder %s45, %s46
    %p55 = scmp.eq.s32.totalorder %s14, 0
    %p56 = por %p54, %p55
    %p57 = scmp.ne.s32.totalorder %s45, %s46
    %p58 = scmp.eq.s32.totalorder %s15, 1
    %p59 = por %p57, %p58
    %p61 = scmp.ne.s32.totalorder %s46, %s60
    %p62 = scmp.eq.s32.totalorder %s15, 0
    %p63 = por %p61, %p62
    %s65 = sadd.s32 %s64, 1
    %p68 = scmp.eq.s32.totalorder %s9, 1
    %p69 = scmp.ne.s32.totalorder %s64, %s66
    %p70 = scmp.eq.s32.totalorder %s9, 0
    %p71 = por %p69, %p70
    %p72 = scmp.ne.s32.totalorder %s64, %s66
    %p73 = scmp.eq.s32.totalorder %s14, 1
    %p74 = por %p72, %p73
    %p75 = scmp.ne.s32.totalorder %s66, %s67
    %p76 = scmp.eq.s32.totalorder %s14, 0
    %p77 = por %p75, %p76
    %p78 = scmp.ne.s32.totalorder %s66, %s67
    %p79 = scmp.eq.s32.totalorder %s15, 1
    %p80 = por %p78, %p79
    %p82 = scmp.ne.s32.totalorder %s67, %s81
    %p83 = scmp.eq.s32.totalorder %s15, 0
    %p84 = por %p82, %p83
    %s85 = ssub.s32 %s9, %s16
    %p86 = scmp.eq.s32.totalorder %s85, 0
    %s88 = sadd.s32 %s87, 1
    %s89 = scalar_select %p86, %s87, %s88
    %p92 = pneg %p86
    %p93 = scmp.eq.s32.totalorder %s9, 1
    %p94 = por %p92, %p93
    %p95 = scmp.ne.s32.totalorder %s87, %s90
    %p96 = scmp.eq.s32.totalorder %s9, 0
    %p97 = por %p95, %p96
    %p98 = scmp.ne.s32.totalorder %s87, %s90
    %p99 = scmp.eq.s32.totalorder %s14, 1
    %p100 = por %p98, %p99
    %p101 = scmp.ne.s32.totalorder %s90, %s91
    %p102 = scmp.eq.s32.totalorder %s14, 0
    %p103 = por %p101, %p102
    %p104 = scmp.ne.s32.totalorder %s90, %s91
    %p105 = scmp.eq.s32.totalorder %s15, 1
    %p106 = por %p104, %p105
    %p108 = scmp.ne.s32.totalorder %s91, %s107
    %p109 = scmp.eq.s32.totalorder %s15, 0
    %p110 = por %p108, %p109
    %p111 = scmp.le.s32.totalorder 1, %s9
    %p112 = scmp.lt.s32.totalorder %s9, 3
    %p113 = pnand %p111, %p112
    %p114 = pneg %p113
    // Predicated region
    $region9: #{conv3d_bn_relu_ndhwc.1} parent=5 // pred_check
      _
    $region10: #{conv3d_bn_relu_ndhwc.1} parent=5 // pred_check_branch
      %116 = sbr.rel (%p113) target = $region12
    $region11: #{conv3d_bn_relu_ndhwc.1} parent=5 // pred_region
      %s117 = ssub.s32 %s9, 1
      // Predicated region
      $region13: #{conv3d_bn_relu_ndhwc.1} parent=11 // pred_check
        %p118 = pneg %p56
      $region14: #{conv3d_bn_relu_ndhwc.1} parent=11 // pred_check_branch
        %120 = sbr.rel (%p118) target = $region16
      $region15: #{conv3d_bn_relu_ndhwc.1} parent=11 // pred_region
        _
      $region16: #{conv3d_bn_relu_ndhwc.1} parent=11 // pred_fallthru
        _
      // Predicated region
      $region17: #{conv3d_bn_relu_ndhwc.1} parent=11 // pred_check
        %p121 = pneg %p77
      $region18: #{conv3d_bn_relu_ndhwc.1} parent=11 // pred_check_branch
        %123 = sbr.rel (%p121) target = $region20
      $region19: #{conv3d_bn_relu_ndhwc.1} parent=11 // pred_region
        _
      $region20: #{conv3d_bn_relu_ndhwc.1} parent=11 // pred_fallthru
        _
    $region12: #{conv3d_bn_relu_ndhwc.1} parent=5 // pred_fallthru
      _
    %p124 = scmp.lt.s32.totalorder %s9, 2
    // Predicated region
    $region21: #{conv3d_bn_relu_ndhwc.1} parent=5 // pred_check
      %p125 = pneg %p124
    $region22: #{conv3d_bn_relu_ndhwc.1} parent=5 // pred_check_branch
      %127 = sbr.rel (%p125) target = $region24
    $region23: #{conv3d_bn_relu_ndhwc.1} parent=5 // pred_region
      // Predicated region
      $region25: #{conv3d_bn_relu_ndhwc.1} parent=23 // pred_check
        %p128 = pneg %p29
      $region26: #{conv3d_bn_relu_ndhwc.1} parent=23 // pred_check_branch
        %130 = sbr.rel (%p128) target = $region28
      $region27: #{conv3d_bn_relu_ndhwc.1} parent=23 // pred_region
        %s131 = smul.u32 16, %s9
        %p132 = scmp.lt.s32.totalorder %s131, 31
        %s133 = scalar_select %p132, %s131, 31
        %s134 = smul.addr %s133, 5
        %s135 = smul.addr %s134, 8
        %s136 = scalar_lea.vmem %s0, %s135
        %s137 = smul.u32 16, %s9
      $region28: #{conv3d_bn_relu_ndhwc.1} parent=23 // pred_fallthru
        _
    $region24: #{conv3d_bn_relu_ndhwc.1} parent=5 // pred_fallthru
      _
    %p138 = scmp.le.s32.totalorder 1, %s9
    %p139 = scmp.lt.s32.totalorder %s9, 3
    %p140 = pnand %p138, %p139
    %p141 = pneg %p140
    // Predicated region
    $region29: #{conv3d_bn_relu_ndhwc.1} parent=5 // pred_check
      _
    $region30: #{conv3d_bn_relu_ndhwc.1} parent=5 // pred_check_branch
      %143 = sbr.rel (%p140) target = $region32
    $region31: #{conv3d_bn_relu_ndhwc.1} parent=5 // pred_region
      %s144 = ssub.s32 %s9, 1
      %s145 = smul.u32 16, %s14
      %p146 = scmp.lt.s32.totalorder %s145, 31
      %s147 = scalar_select %p146, %s145, 31
      %s148 = smul.addr %s147, 5
      %s149 = smul.addr %s148, 8
      %s150 = scalar_lea.vmem %s0, %s149
      %p151 = pneg %p35
      %p152 = pneg %p32
      %p153 = pneg %p56
      %p154 = pneg %p53
      %p155 = pneg %p77
      %p156 = pneg %p74
      %p157 = pneg %p103
      %p158 = pneg %p100
      %s159 = smul.u32 16, %s14
      %p160 = scmp.lt.s32.totalorder %s159, 31
      %s161 = scalar_select %p160, %s159, 31
      %s162 = smul.addr %s161, 4
      %s163 = smul.addr %s162, 8
      %s164 = scalar_lea.vmem %s3, %s163
      %s165 = smul.u32 16, %s14
      %p166 = scmp.lt.s32.totalorder %s165, 31
      %s167 = scalar_select %p166, %s165, 31
      %s168 = smul.addr %s167, 5
      %s169 = smul.addr %s168, 8
      %s170 = scalar_lea.vmem %s0, %s169
      %s171 = smul.u32 16, %s14
      %s172 = smul.u32 16, %s14
      %p173 = scmp.lt.s32.totalorder %s172, 31
      %s174 = scalar_select %p173, %s172, 31
      %s175 = smul.addr %s174, 4
      %s176 = smul.addr %s175, 8
      %s177 = scalar_lea.vmem %s3, %s176
      %s178 = smul.u32 16, %s14
      %v179 = vld [vmem:[%s170] sm:$0xff]
      %v180 = vld [vmem:[%s170 + $0x8] sm:$0xff]
      %v181 = vld [vmem:[%s170 + $0x10] sm:$0xff]
      %v182 = vld [vmem:[%s170 + $0x18] sm:$0xff]
      %v183 = vld [vmem:[%s170 + $0x20] sm:$0xff]
      %v184 = vld [vmem:[%s170 + $0x28] sm:$0xff]
      %v185 = vld [vmem:[%s170 + $0x30] sm:$0xff]
      %v186 = vld [vmem:[%s170 + $0x38] sm:$0xff]
      %v187 = vld [vmem:[%s170 + $0x40] sm:$0xff]
      %v188 = vld [vmem:[%s170 + $0x48] sm:$0xff]
      %v189 = vld [vmem:[%s170 + $0x50] sm:$0xff]
      %v190 = vld [vmem:[%s170 + $0x58] sm:$0xff]
      %v191 = vld [vmem:[%s170 + $0x60] sm:$0xff]
      %v192 = vld [vmem:[%s170 + $0x68] sm:$0xff]
      %v193 = vld [vmem:[%s170 + $0x70] sm:$0xff]
      %v194 = vld [vmem:[%s170 + $0x78] sm:$0xff]
      %v195 = vld [vmem:[%s170 + $0x80] sm:$0xff]
      %v196 = vld [vmem:[%s170 + $0x88] sm:$0xff]
      %v197 = vld [vmem:[%s170 + $0x90] sm:$0xff]
      %v198 = vld [vmem:[%s170 + $0x98] sm:$0xff]
      %v199 = vld [vmem:[%s170 + $0xa0] sm:$0xff]
      %v200 = vld [vmem:[%s170 + $0xa8] sm:$0xff]
      %v201 = vld [vmem:[%s170 + $0xb0] sm:$0xff]
      %v202 = vld [vmem:[%s170 + $0xb8] sm:$0xff]
      %v203 = vld [vmem:[%s170 + $0xc0] sm:$0xff]
      %v204 = vld [vmem:[%s170 + $0xc8] sm:$0xff]
      %v205 = vld [vmem:[%s170 + $0xd0] sm:$0xff]
      %v206 = vld [vmem:[%s170 + $0xd8] sm:$0xff]
      %v207 = vld [vmem:[%s170 + $0xe0] sm:$0xff]
      %v208 = vld [vmem:[%s170 + $0xe8] sm:$0xff]
      %v209 = vld [vmem:[%s170 + $0xf0] sm:$0xff]
      %v210 = vld [vmem:[%s170 + $0xf8] sm:$0xff]
      %v211 = vld [vmem:[%s170 + $0x100] sm:$0xff]
      %v212 = vld [vmem:[%s170 + $0x108] sm:$0xff]
      %v213 = vld [vmem:[%s170 + $0x110] sm:$0xff]
      %v214 = vld [vmem:[%s170 + $0x118] sm:$0xff]
      %v215 = vld [vmem:[%s170 + $0x120] sm:$0xff]
      %v216 = vld [vmem:[%s170 + $0x128] sm:$0xff]
      %v217 = vld [vmem:[%s170 + $0x130] sm:$0xff]
      %v218 = vld [vmem:[%s170 + $0x138] sm:$0xff]
      %v219 = vld [vmem:[%s170 + $0x140] sm:$0xff]
      %v220 = vld [vmem:[%s170 + $0x148] sm:$0xff]
      %v221 = vld [vmem:[%s170 + $0x150] sm:$0xff]
      %v222 = vld [vmem:[%s170 + $0x158] sm:$0xff]
      %v223 = vld [vmem:[%s170 + $0x160] sm:$0xff]
      %v224 = vld [vmem:[%s170 + $0x168] sm:$0xff]
      %v225 = vld [vmem:[%s170 + $0x170] sm:$0xff]
      %v226 = vld [vmem:[%s170 + $0x178] sm:$0xff]
      %v227 = vld [vmem:[%s170 + $0x180] sm:$0xff]
      %v228 = vld [vmem:[%s170 + $0x188] sm:$0xff]
      %v229 = vld [vmem:[%s170 + $0x190] sm:$0xff]
      %v230 = vld [vmem:[%s170 + $0x198] sm:$0xff]
      %v231 = vld [vmem:[%s170 + $0x1a0] sm:$0xff]
      %v232 = vld [vmem:[%s170 + $0x1a8] sm:$0xff]
      %v233 = vld [vmem:[%s170 + $0x1b0] sm:$0xff]
      %v234 = vld [vmem:[%s170 + $0x1b8] sm:$0xff]
      %v235 = vld [vmem:[%s170 + $0x1c0] sm:$0xff]
      %v236 = vld [vmem:[%s170 + $0x1c8] sm:$0xff]
      %v237 = vld [vmem:[%s170 + $0x1d0] sm:$0xff]
      %v238 = vld [vmem:[%s170 + $0x1d8] sm:$0xff]
      %v239 = vld [vmem:[%s170 + $0x1e0] sm:$0xff]
      %v240 = vld [vmem:[%s170 + $0x1e8] sm:$0xff]
      %v241 = vld [vmem:[%s170 + $0x1f0] sm:$0xff]
      %v242 = vld [vmem:[%s170 + $0x1f8] sm:$0xff]
      %v243 = vld [vmem:[%s170 + $0x200] sm:$0xff]
      %v244 = vld [vmem:[%s170 + $0x208] sm:$0xff]
      %v245 = vld [vmem:[%s170 + $0x210] sm:$0xff]
      %v246 = vld [vmem:[%s170 + $0x218] sm:$0xff]
      %v247 = vld [vmem:[%s170 + $0x220] sm:$0xff]
      %v248 = vld [vmem:[%s170 + $0x228] sm:$0xff]
      %v249 = vld [vmem:[%s170 + $0x230] sm:$0xff]
      %v250 = vld [vmem:[%s170 + $0x238] sm:$0xff]
      %v251 = vld [vmem:[%s170 + $0x240] sm:$0xff]
      %v252 = vld [vmem:[%s170 + $0x248] sm:$0xff]
      %v253 = vld [vmem:[%s170 + $0x250] sm:$0xff]
      %v254 = vld [vmem:[%s170 + $0x258] sm:$0xff]
      %v255 = vld [vmem:[%s170 + $0x260] sm:$0xff]
      %v256 = vld [vmem:[%s170 + $0x268] sm:$0xff]
      %v257 = vld [vmem:[%s170 + $0x270] sm:$0xff]
      %v258 = vld [vmem:[%s170 + $0x278] sm:$0xff]
      %v259 = vld [vmem:[%s1] sm:$0xff]
      %v260 = vld [vmem:[%s1 + $0x8] sm:$0xff]
      %v261 = vld [vmem:[%s1 + $0x10] sm:$0xff]
      %v262 = vld [vmem:[%s1 + $0x18] sm:$0xff]
      %v263 = vld [vmem:[%s1 + $0x20] sm:$0xff]
      %v264 = vld [vmem:[%s1 + $0x28] sm:$0xff]
      %v265 = vld [vmem:[%s1 + $0x30] sm:$0xff]
      %v266 = vld [vmem:[%s1 + $0x38] sm:$0xff]
      %v267 = vld [vmem:[%s1 + $0x40] sm:$0xff]
      %v268 = vld [vmem:[%s1 + $0x48] sm:$0xff]
      %v269 = vld [vmem:[%s1 + $0x50] sm:$0xff]
      %v270 = vld [vmem:[%s1 + $0x58] sm:$0xff]
      %v271 = vld [vmem:[%s1 + $0x60] sm:$0xff]
      %v272 = vld [vmem:[%s1 + $0x68] sm:$0xff]
      %v273 = vld [vmem:[%s1 + $0x70] sm:$0xff]
      %v274 = vld [vmem:[%s1 + $0x78] sm:$0xff]
      %v275 = vld [vmem:[%s1 + $0x80] sm:$0xff]
      %v276 = vld [vmem:[%s1 + $0x88] sm:$0xff]
      %v277 = vld [vmem:[%s1 + $0x90] sm:$0xff]
      %v278 = vld [vmem:[%s1 + $0x98] sm:$0xff]
      %v279 = vld [vmem:[%s1 + $0xa0] sm:$0xff]
      %v280 = vld [vmem:[%s1 + $0xa8] sm:$0xff]
      %v281 = vld [vmem:[%s1 + $0xb0] sm:$0xff]
      %v282 = vld [vmem:[%s1 + $0xb8] sm:$0xff]
      %v283 = vld [vmem:[%s1 + $0xc0] sm:$0xff]
      %v284 = vld [vmem:[%s1 + $0xc8] sm:$0xff]
      %v285 = vld [vmem:[%s1 + $0xd0] sm:$0xff]
      %v286 = vld [vmem:[%s1 + $0xd8] sm:$0xff]
      %v287 = vld [vmem:[%s1 + $0xe0] sm:$0xff]
      %v288 = vld [vmem:[%s1 + $0xe8] sm:$0xff]
      %v289 = vld [vmem:[%s1 + $0xf0] sm:$0xff]
      %v290 = vld [vmem:[%s1 + $0xf8] sm:$0xff]
      %v291 = vld [vmem:[%s1 + $0x100] sm:$0xff]
      %v292 = vld [vmem:[%s1 + $0x108] sm:$0xff]
      %v293 = vld [vmem:[%s1 + $0x110] sm:$0xff]
      %v294 = vld [vmem:[%s1 + $0x118] sm:$0xff]
      %v295 = vld [vmem:[%s1 + $0x120] sm:$0xff]
      %v296 = vld [vmem:[%s1 + $0x128] sm:$0xff]
      %v297 = vld [vmem:[%s1 + $0x130] sm:$0xff]
      %v298 = vld [vmem:[%s1 + $0x138] sm:$0xff]
      %v299 = vld [vmem:[%s1 + $0x140] sm:$0xff]
      %v300 = vld [vmem:[%s1 + $0x148] sm:$0xff]
      %v301 = vld [vmem:[%s1 + $0x150] sm:$0xff]
      %v302 = vld [vmem:[%s1 + $0x158] sm:$0xff]
      %v303 = vld [vmem:[%s1 + $0x160] sm:$0xff]
      %v304 = vld [vmem:[%s1 + $0x168] sm:$0xff]
      %v305 = vld [vmem:[%s1 + $0x170] sm:$0xff]
      %v306 = vld [vmem:[%s1 + $0x178] sm:$0xff]
      %v307 = vld [vmem:[%s1 + $0x180] sm:$0xff]
      %v308 = vld [vmem:[%s1 + $0x188] sm:$0xff]
      %v309 = vld [vmem:[%s1 + $0x190] sm:$0xff]
      %v310 = vld [vmem:[%s1 + $0x198] sm:$0xff]
      %v311 = vld [vmem:[%s1 + $0x1a0] sm:$0xff]
      %v312 = vld [vmem:[%s1 + $0x1a8] sm:$0xff]
      %v313 = vld [vmem:[%s1 + $0x1b0] sm:$0xff]
      %v314 = vld [vmem:[%s1 + $0x1b8] sm:$0xff]
      %v315 = vld [vmem:[%s1 + $0x1c0] sm:$0xff]
      %v316 = vld [vmem:[%s1 + $0x1c8] sm:$0xff]
      %v317 = vld [vmem:[%s1 + $0x1d0] sm:$0xff]
      %v318 = vld [vmem:[%s1 + $0x1d8] sm:$0xff]
      %v319 = vld [vmem:[%s1 + $0x1e0] sm:$0xff]
      %v320 = vld [vmem:[%s1 + $0x1e8] sm:$0xff]
      %v321 = vld [vmem:[%s1 + $0x1f0] sm:$0xff]
      %v322 = vld [vmem:[%s1 + $0x1f8] sm:$0xff]
      %v323 = vld [vmem:[%s1 + $0x200] sm:$0xff]
      %v324 = vld [vmem:[%s1 + $0x208] sm:$0xff]
      %v325 = vld [vmem:[%s1 + $0x210] sm:$0xff]
      %v326 = vld [vmem:[%s1 + $0x218] sm:$0xff]
      %v327 = vld [vmem:[%s1 + $0x220] sm:$0xff]
      %v328 = vld [vmem:[%s1 + $0x228] sm:$0xff]
      %v329 = vld [vmem:[%s1 + $0x230] sm:$0xff]
      %v330 = vld [vmem:[%s1 + $0x238] sm:$0xff]
      %v331 = vld [vmem:[%s1 + $0x240] sm:$0xff]
      %v332 = vld [vmem:[%s1 + $0x248] sm:$0xff]
      %v333 = vld [vmem:[%s1 + $0x250] sm:$0xff]
      %v334 = vld [vmem:[%s1 + $0x258] sm:$0xff]
      %v335 = vld [vmem:[%s1 + $0x260] sm:$0xff]
      %v336 = vld [vmem:[%s1 + $0x268] sm:$0xff]
      %v337 = vld [vmem:[%s1 + $0x270] sm:$0xff]
      %v338 = vld [vmem:[%s1 + $0x278] sm:$0xff]
      %v339 = vld [vmem:[%s1 + $0x280] sm:$0xff]
      %v340 = vld [vmem:[%s1 + $0x288] sm:$0xff]
      %v341 = vld [vmem:[%s1 + $0x290] sm:$0xff]
      %v342 = vld [vmem:[%s1 + $0x298] sm:$0xff]
      %v343 = vld [vmem:[%s1 + $0x2a0] sm:$0xff]
      %v344 = vld [vmem:[%s1 + $0x2a8] sm:$0xff]
      %v345 = vld [vmem:[%s1 + $0x2b0] sm:$0xff]
      %v346 = vld [vmem:[%s1 + $0x2b8] sm:$0xff]
      %v347 = vld [vmem:[%s1 + $0x2c0] sm:$0xff]
      %v348 = vld [vmem:[%s1 + $0x2c8] sm:$0xff]
      %v349 = vld [vmem:[%s1 + $0x2d0] sm:$0xff]
      %v350 = vld [vmem:[%s1 + $0x2d8] sm:$0xff]
      %v351 = vld [vmem:[%s1 + $0x2e0] sm:$0xff]
      %v352 = vld [vmem:[%s1 + $0x2e8] sm:$0xff]
      %v353 = vld [vmem:[%s1 + $0x2f0] sm:$0xff]
      %v354 = vld [vmem:[%s1 + $0x2f8] sm:$0xff]
      %v355 = vld [vmem:[%s1 + $0x300] sm:$0xff]
      %v356 = vld [vmem:[%s1 + $0x308] sm:$0xff]
      %v357 = vld [vmem:[%s1 + $0x310] sm:$0xff]
      %v358 = vld [vmem:[%s1 + $0x318] sm:$0xff]
      %v359 = vld [vmem:[%s1 + $0x320] sm:$0xff]
      %v360 = vld [vmem:[%s1 + $0x328] sm:$0xff]
      %v361 = vld [vmem:[%s1 + $0x330] sm:$0xff]
      %v362 = vld [vmem:[%s1 + $0x338] sm:$0xff]
      %v363 = vld [vmem:[%s1 + $0x340] sm:$0xff]
      %v364 = vld [vmem:[%s1 + $0x348] sm:$0xff]
      %v365 = vld [vmem:[%s1 + $0x350] sm:$0xff]
      %v366 = vld [vmem:[%s1 + $0x358] sm:$0xff]
      %v367 = vld [vmem:[%s1 + $0x360] sm:$0xff]
      %v368 = vld [vmem:[%s1 + $0x368] sm:$0xff]
      %v369 = vld [vmem:[%s1 + $0x370] sm:$0xff]
      %v370 = vld [vmem:[%s1 + $0x378] sm:$0xff]
      %v371 = vld [vmem:[%s1 + $0x380] sm:$0xff]
      %v372 = vld [vmem:[%s1 + $0x388] sm:$0xff]
      %v373 = vld [vmem:[%s1 + $0x390] sm:$0xff]
      %v374 = vld [vmem:[%s1 + $0x398] sm:$0xff]
      %v375 = vld [vmem:[%s1 + $0x3a0] sm:$0xff]
      %v376 = vld [vmem:[%s1 + $0x3a8] sm:$0xff]
      %v377 = vld [vmem:[%s1 + $0x3b0] sm:$0xff]
      %v378 = vld [vmem:[%s1 + $0x3b8] sm:$0xff]
      %v379 = vld [vmem:[%s1 + $0x3c0] sm:$0xff]
      %v380 = vld [vmem:[%s1 + $0x3c8] sm:$0xff]
      %v381 = vld [vmem:[%s1 + $0x3d0] sm:$0xff]
      %v382 = vld [vmem:[%s1 + $0x3d8] sm:$0xff]
      %v383 = vld [vmem:[%s1 + $0x3e0] sm:$0xff]
      %v384 = vld [vmem:[%s1 + $0x3e8] sm:$0xff]
      %v385 = vld [vmem:[%s1 + $0x3f0] sm:$0xff]
      %v386 = vld [vmem:[%s1 + $0x3f8] sm:$0xff]
      %v387 = vld [vmem:[%s1 + $0x400] sm:$0xff]
      %v388 = vld [vmem:[%s1 + $0x408] sm:$0xff]
      %v389 = vld [vmem:[%s1 + $0x410] sm:$0xff]
      %v390 = vld [vmem:[%s1 + $0x418] sm:$0xff]
      %v391 = vld [vmem:[%s1 + $0x420] sm:$0xff]
      %v392 = vld [vmem:[%s1 + $0x428] sm:$0xff]
      %v393 = vld [vmem:[%s1 + $0x430] sm:$0xff]
      %v394 = vld [vmem:[%s1 + $0x438] sm:$0xff]
      %v395 = vld [vmem:[%s1 + $0x440] sm:$0xff]
      %v396 = vld [vmem:[%s1 + $0x448] sm:$0xff]
      %v397 = vld [vmem:[%s1 + $0x450] sm:$0xff]
      %v398 = vld [vmem:[%s1 + $0x458] sm:$0xff]
      %v399 = vld [vmem:[%s1 + $0x460] sm:$0xff]
      %v400 = vld [vmem:[%s1 + $0x468] sm:$0xff]
      %v401 = vld [vmem:[%s1 + $0x470] sm:$0xff]
      %v402 = vld [vmem:[%s1 + $0x478] sm:$0xff]
      %v403 = vld [vmem:[%s1 + $0x480] sm:$0xff]
      %v404 = vld [vmem:[%s1 + $0x488] sm:$0xff]
      %v405 = vld [vmem:[%s1 + $0x490] sm:$0xff]
      %v406 = vld [vmem:[%s1 + $0x498] sm:$0xff]
      %v407 = vld [vmem:[%s1 + $0x4a0] sm:$0xff]
      %v408 = vld [vmem:[%s1 + $0x4a8] sm:$0xff]
      %v409 = vld [vmem:[%s1 + $0x4b0] sm:$0xff]
      %v410 = vld [vmem:[%s1 + $0x4b8] sm:$0xff]
      %v411 = vld [vmem:[%s1 + $0x4c0] sm:$0xff]
      %v412 = vld [vmem:[%s1 + $0x4c8] sm:$0xff]
      %v413 = vld [vmem:[%s1 + $0x4d0] sm:$0xff]
      %v414 = vld [vmem:[%s1 + $0x4d8] sm:$0xff]
      %v415 = vld [vmem:[%s1 + $0x4e0] sm:$0xff]
      %v416 = vld [vmem:[%s1 + $0x4e8] sm:$0xff]
      %v417 = vld [vmem:[%s1 + $0x4f0] sm:$0xff]
      %v418 = vld [vmem:[%s1 + $0x4f8] sm:$0xff]
      %v419 = vld [vmem:[%s1 + $0x500] sm:$0xff]
      %v420 = vld [vmem:[%s1 + $0x508] sm:$0xff]
      %v421 = vld [vmem:[%s1 + $0x510] sm:$0xff]
      %v422 = vld [vmem:[%s1 + $0x518] sm:$0xff]
      %v423 = vld [vmem:[%s1 + $0x520] sm:$0xff]
      %v424 = vld [vmem:[%s1 + $0x528] sm:$0xff]
      %v425 = vld [vmem:[%s1 + $0x530] sm:$0xff]
      %v426 = vld [vmem:[%s1 + $0x538] sm:$0xff]
      %v427 = vld [vmem:[%s1 + $0x540] sm:$0xff]
      %v428 = vld [vmem:[%s1 + $0x548] sm:$0xff]
      %v429 = vld [vmem:[%s1 + $0x550] sm:$0xff]
      %v430 = vld [vmem:[%s1 + $0x558] sm:$0xff]
      %v431 = vld [vmem:[%s1 + $0x560] sm:$0xff]
      %v432 = vld [vmem:[%s1 + $0x568] sm:$0xff]
      %v433 = vld [vmem:[%s1 + $0x570] sm:$0xff]
      %v434 = vld [vmem:[%s1 + $0x578] sm:$0xff]
      %v435 = vld [vmem:[%s1 + $0x580] sm:$0xff]
      %v436 = vld [vmem:[%s1 + $0x588] sm:$0xff]
      %v437 = vld [vmem:[%s1 + $0x590] sm:$0xff]
      %v438 = vld [vmem:[%s1 + $0x598] sm:$0xff]
      %v439 = vld [vmem:[%s1 + $0x5a0] sm:$0xff]
      %v440 = vld [vmem:[%s1 + $0x5a8] sm:$0xff]
      %v441 = vld [vmem:[%s1 + $0x5b0] sm:$0xff]
      %v442 = vld [vmem:[%s1 + $0x5b8] sm:$0xff]
      %v443 = vld [vmem:[%s1 + $0x5c0] sm:$0xff]
      %v444 = vld [vmem:[%s1 + $0x5c8] sm:$0xff]
      %v445 = vld [vmem:[%s1 + $0x5d0] sm:$0xff]
      %v446 = vld [vmem:[%s1 + $0x5d8] sm:$0xff]
      %v447 = vld [vmem:[%s1 + $0x5e0] sm:$0xff]
      %v448 = vld [vmem:[%s1 + $0x5e8] sm:$0xff]
      %v449 = vld [vmem:[%s1 + $0x5f0] sm:$0xff]
      %v450 = vld [vmem:[%s1 + $0x5f8] sm:$0xff]
      %v451 = vld [vmem:[%s1 + $0x600] sm:$0xff]
      %v452 = vld [vmem:[%s1 + $0x608] sm:$0xff]
      %v453 = vld [vmem:[%s1 + $0x610] sm:$0xff]
      %v454 = vld [vmem:[%s1 + $0x618] sm:$0xff]
      %v455 = vld [vmem:[%s1 + $0x620] sm:$0xff]
      %v456 = vld [vmem:[%s1 + $0x628] sm:$0xff]
      %v457 = vld [vmem:[%s1 + $0x630] sm:$0xff]
      %v458 = vld [vmem:[%s1 + $0x638] sm:$0xff]
      %v459 = vld [vmem:[%s1 + $0x640] sm:$0xff]
      %v460 = vld [vmem:[%s1 + $0x648] sm:$0xff]
      %v461 = vld [vmem:[%s1 + $0x650] sm:$0xff]
      %v462 = vld [vmem:[%s1 + $0x658] sm:$0xff]
      %v463 = vld [vmem:[%s1 + $0x660] sm:$0xff]
      %v464 = vld [vmem:[%s1 + $0x668] sm:$0xff]
      %v465 = vld [vmem:[%s1 + $0x670] sm:$0xff]
      %v466 = vld [vmem:[%s1 + $0x678] sm:$0xff]
      %v467 = vld [vmem:[%s1 + $0x680] sm:$0xff]
      %v468 = vld [vmem:[%s1 + $0x688] sm:$0xff]
      %v469 = vld [vmem:[%s1 + $0x690] sm:$0xff]
      %v470 = vld [vmem:[%s1 + $0x698] sm:$0xff]
      %v471 = vld [vmem:[%s1 + $0x6a0] sm:$0xff]
      %v472 = vld [vmem:[%s1 + $0x6a8] sm:$0xff]
      %v473 = vld [vmem:[%s1 + $0x6b0] sm:$0xff]
      %v474 = vld [vmem:[%s1 + $0x6b8] sm:$0xff]
      %v475 = vld [vmem:[%s1 + $0x6c0] sm:$0xff]
      %v476 = vld [vmem:[%s1 + $0x6c8] sm:$0xff]
      %v477 = vld [vmem:[%s1 + $0x6d0] sm:$0xff]
      %v478 = vld [vmem:[%s1 + $0x6d8] sm:$0xff]
      %v479 = vld [vmem:[%s1 + $0x6e0] sm:$0xff]
      %v480 = vld [vmem:[%s1 + $0x6e8] sm:$0xff]
      %v481 = vld [vmem:[%s1 + $0x6f0] sm:$0xff]
      %v482 = vld [vmem:[%s1 + $0x6f8] sm:$0xff]
      %v483 = vld [vmem:[%s1 + $0x700] sm:$0xff]
      %v484 = vld [vmem:[%s1 + $0x708] sm:$0xff]
      %v485 = vld [vmem:[%s1 + $0x710] sm:$0xff]
      %v486 = vld [vmem:[%s1 + $0x718] sm:$0xff]
      %v487 = vld [vmem:[%s1 + $0x720] sm:$0xff]
      %v488 = vld [vmem:[%s1 + $0x728] sm:$0xff]
      %v489 = vld [vmem:[%s1 + $0x730] sm:$0xff]
      %v490 = vld [vmem:[%s1 + $0x738] sm:$0xff]
      %v491 = vld [vmem:[%s1 + $0x740] sm:$0xff]
      %v492 = vld [vmem:[%s1 + $0x748] sm:$0xff]
      %v493 = vld [vmem:[%s1 + $0x750] sm:$0xff]
      %v494 = vld [vmem:[%s1 + $0x758] sm:$0xff]
      %v495 = vld [vmem:[%s1 + $0x760] sm:$0xff]
      %v496 = vld [vmem:[%s1 + $0x768] sm:$0xff]
      %v497 = vld [vmem:[%s1 + $0x770] sm:$0xff]
      %v498 = vld [vmem:[%s1 + $0x778] sm:$0xff]
      %v499 = vld [vmem:[%s1 + $0x780] sm:$0xff]
      %v500 = vld [vmem:[%s1 + $0x788] sm:$0xff]
      %v501 = vld [vmem:[%s1 + $0x790] sm:$0xff]
      %v502 = vld [vmem:[%s1 + $0x798] sm:$0xff]
      %v503 = vld [vmem:[%s1 + $0x7a0] sm:$0xff]
      %v504 = vld [vmem:[%s1 + $0x7a8] sm:$0xff]
      %v505 = vld [vmem:[%s1 + $0x7b0] sm:$0xff]
      %v506 = vld [vmem:[%s1 + $0x7b8] sm:$0xff]
      %v507 = vld [vmem:[%s1 + $0x7c0] sm:$0xff]
      %v508 = vld [vmem:[%s1 + $0x7c8] sm:$0xff]
      %v509 = vld [vmem:[%s1 + $0x7d0] sm:$0xff]
      %v510 = vld [vmem:[%s1 + $0x7d8] sm:$0xff]
      %v511 = vld [vmem:[%s1 + $0x7e0] sm:$0xff]
      %v512 = vld [vmem:[%s1 + $0x7e8] sm:$0xff]
      %v513 = vld [vmem:[%s1 + $0x7f0] sm:$0xff]
      %v514 = vld [vmem:[%s1 + $0x7f8] sm:$0xff]
      %v515 = vld [vmem:[%s1 + $0x800] sm:$0xff]
      %v516 = vld [vmem:[%s1 + $0x808] sm:$0xff]
      %v517 = vld [vmem:[%s1 + $0x810] sm:$0xff]
      %v518 = vld [vmem:[%s1 + $0x818] sm:$0xff]
      %v519 = vld [vmem:[%s1 + $0x820] sm:$0xff]
      %v520 = vld [vmem:[%s1 + $0x828] sm:$0xff]
      %v521 = vld [vmem:[%s1 + $0x830] sm:$0xff]
      %v522 = vld [vmem:[%s1 + $0x838] sm:$0xff]
      %v523 = vld [vmem:[%s1 + $0x840] sm:$0xff]
      %v524 = vld [vmem:[%s1 + $0x848] sm:$0xff]
      %v525 = vld [vmem:[%s1 + $0x850] sm:$0xff]
      %v526 = vld [vmem:[%s1 + $0x858] sm:$0xff]
      %v527 = vld [vmem:[%s1 + $0x860] sm:$0xff]
      %v528 = vld [vmem:[%s1 + $0x868] sm:$0xff]
      %v529 = vld [vmem:[%s1 + $0x870] sm:$0xff]
      %v530 = vld [vmem:[%s1 + $0x878] sm:$0xff]
      %v531 = vld [vmem:[%s1 + $0x880] sm:$0xff]
      %v532 = vld [vmem:[%s1 + $0x888] sm:$0xff]
      %v533 = vld [vmem:[%s1 + $0x890] sm:$0xff]
      %v534 = vld [vmem:[%s1 + $0x898] sm:$0xff]
      %v535 = vld [vmem:[%s1 + $0x8a0] sm:$0xff]
      %v536 = vld [vmem:[%s1 + $0x8a8] sm:$0xff]
      %v537 = vld [vmem:[%s1 + $0x8b0] sm:$0xff]
      %v538 = vld [vmem:[%s1 + $0x8b8] sm:$0xff]
      %v539 = vld [vmem:[%s1 + $0x8c0] sm:$0xff]
      %v540 = vld [vmem:[%s1 + $0x8c8] sm:$0xff]
      %v541 = vld [vmem:[%s1 + $0x8d0] sm:$0xff]
      %v542 = vld [vmem:[%s1 + $0x8d8] sm:$0xff]
      %v543 = vld [vmem:[%s1 + $0x8e0] sm:$0xff]
      %v544 = vld [vmem:[%s1 + $0x8e8] sm:$0xff]
      %v545 = vld [vmem:[%s1 + $0x8f0] sm:$0xff]
      %v546 = vld [vmem:[%s1 + $0x8f8] sm:$0xff]
      %v547 = vld [vmem:[%s2] sm:$0xf]
      %v549 = vlaneseq
      %v550 = vshrl.u32 %v549, 7
      %v551 = vsub.s32 0, %v550
      %v552 = vrot.slane %v547, %v551
      %v553 = vlaneseq
      %v554 = vshrl.u32 %v553, 7
      %v555 = vsub.s32 1, %v554
      %v556 = vrot.slane %v547, %v555
      %v557 = vlaneseq
      %v558 = vshrl.u32 %v557, 7
      %v559 = vsub.s32 2, %v558
      %v560 = vrot.slane %v547, %v559
      %v561 = vlaneseq
      %v562 = vshrl.u32 %v561, 7
      %v563 = vsub.s32 3, %v562
      %v564 = vrot.slane %v547, %v563
      %vm569 = vcmask 523264
      %v571 = vsel %vm569, %v183, 0
      %v574 = vsel %vm569, %v188, 0
      %v577 = vsel %vm569, %v193, 0
      %v580 = vsel %vm569, %v198, 0
      %v583 = vsel %vm569, %v203, 0
      %v586 = vsel %vm569, %v208, 0
      %v589 = vsel %vm569, %v213, 0
      %v592 = vsel %vm569, %v218, 0
      %v595 = vsel %vm569, %v223, 0
      %v598 = vsel %vm569, %v228, 0
      %v601 = vsel %vm569, %v233, 0
      %v604 = vsel %vm569, %v238, 0
      %v607 = vsel %vm569, %v243, 0
      %v610 = vsel %vm569, %v248, 0
      %v613 = vsel %vm569, %v253, 0
      %v616 = vsel %vm569, %v258, 0
      %618 = vmatprep.subr.mxu0 %v260
      %619 = vmatpush1.msra.mxu0 %v259
      %620 = vmatprep.subr.mxu0 %v264
      %621 = vmatpush1.msra.mxu0 %v263
      %622 = vmatprep.subr.mxu0 %v268
      %623 = vmatpush1.msra.mxu0 %v267
      %624 = vmatprep.subr.mxu0 %v272
      %625 = vmatpush1.msra.mxu0 %v271
      %626 = vmatprep.subr.mxu0 %v276
      %627 = vmatpush1.msra.mxu0 %v275
      %628 = vmatprep.subr.mxu0 %v280
      %629 = vmatpush1.msra.mxu0 %v279
      %630 = vmatprep.subr.mxu0 %v284
      %631 = vmatpush1.msra.mxu0 %v283
      %632 = vmatprep.subr.mxu0 %v288
      %633 = vmatpush1.msra.mxu0 %v287
      %634 = vmatprep.subr.mxu0 %v292
      %635 = vmatpush1.msra.mxu0 %v291
      %636 = vmatprep.subr.mxu0 %v296
      %637 = vmatpush1.msra.mxu0 %v295
      %638 = vmatprep.subr.mxu0 %v300
      %639 = vmatpush1.msra.mxu0 %v299
      %640 = vmatprep.subr.mxu0 %v304
      %641 = vmatpush1.msra.mxu0 %v303
      %642 = vmatprep.subr.mxu0 %v308
      %643 = vmatpush1.msra.mxu0 %v307
      %644 = vmatprep.subr.mxu0 %v312
      %645 = vmatpush1.msra.mxu0 %v311
      %646 = vmatprep.subr.mxu0 %v316
      %647 = vmatpush1.msra.mxu0 %v315
      %648 = vmatprep.subr.mxu0 %v320
      %649 = vmatpush1.msra.mxu0 %v319
      %650 = vmatprep.subr.mxu0 %v324
      %651 = vmatpush1.msra.mxu0 %v323
      %652 = vmatprep.subr.mxu0 %v328
      %653 = vmatpush1.msra.mxu0 %v327
      %654 = vmatprep.subr.mxu0 %v332
      %655 = vmatpush1.msra.mxu0 %v331
      %656 = vmatprep.subr.mxu0 %v336
      %657 = vmatpush1.msra.mxu0 %v335
      %658 = vmatprep.subr.mxu0 %v340
      %659 = vmatpush1.msra.mxu0 %v339
      %660 = vmatprep.subr.mxu0 %v344
      %661 = vmatpush1.msra.mxu0 %v343
      %662 = vmatprep.subr.mxu0 %v348
      %663 = vmatpush1.msra.mxu0 %v347
      %664 = vmatprep.subr.mxu0 %v352
      %665 = vmatpush1.msra.mxu0 %v351
      %666 = vmatprep.subr.mxu0 %v356
      %667 = vmatpush1.msra.mxu0 %v355
      %668 = vmatprep.subr.mxu0 %v360
      %669 = vmatpush1.msra.mxu0 %v359
      %670 = vmatprep.subr.mxu0 %v364
      %671 = vmatpush1.msra.mxu0 %v363
      %672 = vmatprep.subr.mxu0 %v368
      %673 = vmatpush1.msra.mxu0 %v367
      %674 = vmatprep.subr.mxu0 %v372
      %675 = vmatpush1.msra.mxu0 %v371
      %676 = vmatprep.subr.mxu0 %v376
      %677 = vmatpush1.msra.mxu0 %v375
      %678 = vmatprep.subr.mxu0 %v380
      %679 = vmatpush1.msra.mxu0 %v379
      %680 = vmatprep.subr.mxu0 %v384
      %681 = vmatpush1.msra.mxu0 %v383
      %682 = vmatprep.mubr.f32.mxu0 %v180
      %683 = vmatmul.mubr.f32.gmra.mrb[0].mxu0 %v179
      %v684 = vpop.f32.mrb[0].mxu0
      %v685 = vadd.f32 %v552, %v684
      %v686 = vpop.f32.mrb[0].mxu0
      %v687 = vadd.f32 %v556, %v686
      %688 = vmatprep.mubr.f32.mxu0 %v185
      %689 = vmatmul.mubr.f32.gmra.mrb[0].mxu0 %v184
      %v690 = vpop.f32.mrb[0].mxu0
      %v691 = vadd.f32 %v552, %v690
      %v692 = vpop.f32.mrb[0].mxu0
      %v693 = vadd.f32 %v556, %v692
      %694 = vmatprep.mubr.f32.mxu0 %v190
      %695 = vmatmul.mubr.f32.gmra.mrb[0].mxu0 %v189
      %v696 = vpop.f32.mrb[0].mxu0
      %v697 = vadd.f32 %v552, %v696
      %v698 = vpop.f32.mrb[0].mxu0
      %v699 = vadd.f32 %v556, %v698
      %700 = vmatprep.mubr.f32.mxu0 %v195
      %701 = vmatmul.mubr.f32.gmra.mrb[0].mxu0 %v194
      %v702 = vpop.f32.mrb[0].mxu0
      %v703 = vadd.f32 %v552, %v702
      %v704 = vpop.f32.mrb[0].mxu0
      %v705 = vadd.f32 %v556, %v704
      %706 = vmatprep.mubr.f32.mxu0 %v200
      %707 = vmatmul.mubr.f32.gmra.mrb[0].mxu0 %v199
      %v708 = vpop.f32.mrb[0].mxu0
      %v709 = vadd.f32 %v552, %v708
      %v710 = vpop.f32.mrb[0].mxu0
      %v711 = vadd.f32 %v556, %v710
      %712 = vmatprep.mubr.f32.mxu0 %v205
      %713 = vmatmul.mubr.f32.gmra.mrb[0].mxu0 %v204
      %v714 = vpop.f32.mrb[0].mxu0
      %v715 = vadd.f32 %v552, %v714
      %v716 = vpop.f32.mrb[0].mxu0
      %v717 = vadd.f32 %v556, %v716
      %718 = vmatprep.mubr.f32.mxu0 %v210
      %719 = vmatmul.mubr.f32.gmra.mrb[0].mxu0 %v209
      %v720 = vpop.f32.mrb[0].mxu0
      %v721 = vadd.f32 %v552, %v720
      %v722 = vpop.f32.mrb[0].mxu0
      %v723 = vadd.f32 %v556, %v722
      %724 = vmatprep.mubr.f32.mxu0 %v215
      %725 = vmatmul.mubr.f32.gmra.mrb[0].mxu0 %v214
      %v726 = vpop.f32.mrb[0].mxu0
      %v727 = vadd.f32 %v552, %v726
      %v728 = vpop.f32.mrb[0].mxu0
      %v729 = vadd.f32 %v556, %v728
      %730 = vmatprep.mubr.f32.mxu0 %v220
      %731 = vmatmul.mubr.f32.gmra.mrb[0].mxu0 %v219
      %v732 = vpop.f32.mrb[0].mxu0
      %v733 = vadd.f32 %v552, %v732
      %v734 = vpop.f32.mrb[0].mxu0
      %v735 = vadd.f32 %v556, %v734
      %736 = vmatprep.mubr.f32.mxu0 %v225
      %737 = vmatmul.mubr.f32.gmra.mrb[0].mxu0 %v224
      %v738 = vpop.f32.mrb[0].mxu0
      %v739 = vadd.f32 %v552, %v738
      %v740 = vpop.f32.mrb[0].mxu0
      %v741 = vadd.f32 %v556, %v740
      %742 = vmatprep.mubr.f32.mxu0 %v230
      %743 = vmatmul.mubr.f32.gmra.mrb[0].mxu0 %v229
      %v744 = vpop.f32.mrb[0].mxu0
      %v745 = vadd.f32 %v552, %v744
      %v746 = vpop.f32.mrb[0].mxu0
      %v747 = vadd.f32 %v556, %v746
      %748 = vmatprep.mubr.f32.mxu0 %v235
      %749 = vmatmul.mubr.f32.gmra.mrb[0].mxu0 %v234
      %v750 = vpop.f32.mrb[0].mxu0
      %v751 = vadd.f32 %v552, %v750
      %v752 = vpop.f32.mrb[0].mxu0
      %v753 = vadd.f32 %v556, %v752
      %754 = vmatprep.mubr.f32.mxu0 %v240
      %755 = vmatmul.mubr.f32.gmra.mrb[0].mxu0 %v239
      %v756 = vpop.f32.mrb[0].mxu0
      %v757 = vadd.f32 %v552, %v756
      %v758 = vpop.f32.mrb[0].mxu0
      %v759 = vadd.f32 %v556, %v758
      %760 = vmatprep.mubr.f32.mxu0 %v245
      %761 = vmatmul.mubr.f32.gmra.mrb[0].mxu0 %v244
      %v762 = vpop.f32.mrb[0].mxu0
      %v763 = vadd.f32 %v552, %v762
      %v764 = vpop.f32.mrb[0].mxu0
      %v765 = vadd.f32 %v556, %v764
      %766 = vmatprep.mubr.f32.mxu0 %v250
      %767 = vmatmul.mubr.f32.gmra.mrb[0].mxu0 %v249
      %v768 = vpop.f32.mrb[0].mxu0
      %v769 = vadd.f32 %v552, %v768
      %v770 = vpop.f32.mrb[0].mxu0
      %v771 = vadd.f32 %v556, %v770
      %772 = vmatprep.mubr.f32.mxu0 %v255
      %773 = vmatmul.mubr.f32.gmra.mrb[0].mxu0 %v254
      %v774 = vpop.f32.mrb[0].mxu0
      %v775 = vadd.f32 %v552, %v774
      %v776 = vpop.f32.mrb[0].mxu0
      %v777 = vadd.f32 %v556, %v776
      %778 = vdwg.mxu0
      %779 = vmatprep.subr.mxu0 %v388
      %780 = vmatpush1.msra.mxu0 %v387
      %781 = vmatprep.subr.mxu0 %v392
      %782 = vmatpush1.msra.mxu0 %v391
      %783 = vmatprep.subr.mxu0 %v396
      %784 = vmatpush1.msra.mxu0 %v395
      %785 = vmatprep.subr.mxu0 %v400
      %786 = vmatpush1.msra.mxu0 %v399
      %787 = vmatprep.subr.mxu0 %v404
      %788 = vmatpush1.msra.mxu0 %v403
      %789 = vmatprep.subr.mxu0 %v408
      %790 = vmatpush1.msra.mxu0 %v407
      %791 = vmatprep.subr.mxu0 %v412
      %792 = vmatpush1.msra.mxu0 %v411
      %793 = vmatprep.subr.mxu0 %v416
      %794 = vmatpush1.msra.mxu0 %v415
      %795 = vmatprep.subr.mxu0 %v420
      %796 = vmatpush1.msra.mxu0 %v419
      %797 = vmatprep.subr.mxu0 %v424
      %798 = vmatpush1.msra.mxu0 %v423
      %799 = vmatprep.subr.mxu0 %v428
      %800 = vmatpush1.msra.mxu0 %v427
      %801 = vmatprep.subr.mxu0 %v432
      %802 = vmatpush1.msra.mxu0 %v431
      %803 = vmatprep.subr.mxu0 %v436
      %804 = vmatpush1.msra.mxu0 %v435
      %805 = vmatprep.subr.mxu0 %v440
      %806 = vmatpush1.msra.mxu0 %v439
      %807 = vmatprep.subr.mxu0 %v444
      %808 = vmatpush1.msra.mxu0 %v443
      %809 = vmatprep.subr.mxu0 %v448
      %810 = vmatpush1.msra.mxu0 %v447
      %811 = vmatprep.subr.mxu0 %v452
      %812 = vmatpush1.msra.mxu0 %v451
      %813 = vmatprep.subr.mxu0 %v456
      %814 = vmatpush1.msra.mxu0 %v455
      %815 = vmatprep.subr.mxu0 %v460
      %816 = vmatpush1.msra.mxu0 %v459
      %817 = vmatprep.subr.mxu0 %v464
      %818 = vmatpush1.msra.mxu0 %v463
      %819 = vmatprep.subr.mxu0 %v468
      %820 = vmatpush1.msra.mxu0 %v467
      %821 = vmatprep.subr.mxu0 %v472
      %822 = vmatpush1.msra.mxu0 %v471
      %823 = vmatprep.subr.mxu0 %v476
      %824 = vmatpush1.msra.mxu0 %v475
      %825 = vmatprep.subr.mxu0 %v480
      %826 = vmatpush1.msra.mxu0 %v479
      %827 = vmatprep.subr.mxu0 %v484
      %828 = vmatpush1.msra.mxu0 %v483
      %829 = vmatprep.subr.mxu0 %v488
      %830 = vmatpush1.msra.mxu0 %v487
      %831 = vmatprep.subr.mxu0 %v492
      %832 = vmatpush1.msra.mxu0 %v491
      %833 = vmatprep.subr.mxu0 %v496
      %834 = vmatpush1.msra.mxu0 %v495
      %835 = vmatprep.subr.mxu0 %v500
      %836 = vmatpush1.msra.mxu0 %v499
      %837 = vmatprep.subr.mxu0 %v504
      %838 = vmatpush1.msra.mxu0 %v503
      %839 = vmatprep.subr.mxu0 %v508
      %840 = vmatpush1.msra.mxu0 %v507
      %841 = vmatprep.subr.mxu0 %v512
      %842 = vmatpush1.msra.mxu0 %v511
      %843 = vmatprep.mubr.f32.mxu0 %v182
      %844 = vmatmul.mubr.f32.gmra.mrb[0].mxu0 %v181
      %v845 = vpop.f32.mrb[0].mxu0
      %v846 = vadd.f32 %v685, %v845
      %v847 = vpop.f32.mrb[0].mxu0
      %v848 = vadd.f32 %v687, %v847
      %849 = vmatprep.mubr.f32.mxu0 %v187
      %850 = vmatmul.mubr.f32.gmra.mrb[0].mxu0 %v186
      %v851 = vpop.f32.mrb[0].mxu0
      %v852 = vadd.f32 %v691, %v851
      %v853 = vpop.f32.mrb[0].mxu0
      %v854 = vadd.f32 %v693, %v853
      %855 = vmatprep.mubr.f32.mxu0 %v192
      %856 = vmatmul.mubr.f32.gmra.mrb[0].mxu0 %v191
      %v857 = vpop.f32.mrb[0].mxu0
      %v858 = vadd.f32 %v697, %v857
      %v859 = vpop.f32.mrb[0].mxu0
      %v860 = vadd.f32 %v699, %v859
      %861 = vmatprep.mubr.f32.mxu0 %v197
      %862 = vmatmul.mubr.f32.gmra.mrb[0].mxu0 %v196
      %v863 = vpop.f32.mrb[0].mxu0
      %v864 = vadd.f32 %v703, %v863
      %v865 = vpop.f32.mrb[0].mxu0
      %v866 = vadd.f32 %v705, %v865
      %867 = vmatprep.mubr.f32.mxu0 %v202
      %868 = vmatmul.mubr.f32.gmra.mrb[0].mxu0 %v201
      %v869 = vpop.f32.mrb[0].mxu0
      %v870 = vadd.f32 %v709, %v869
      %v871 = vpop.f32.mrb[0].mxu0
      %v872 = vadd.f32 %v711, %v871
      %873 = vmatprep.mubr.f32.mxu0 %v207
      %874 = vmatmul.mubr.f32.gmra.mrb[0].mxu0 %v206
      %v875 = vpop.f32.mrb[0].mxu0
      %v876 = vadd.f32 %v715, %v875
      %v877 = vpop.f32.mrb[0].mxu0
      %v878 = vadd.f32 %v717, %v877
      %879 = vmatprep.mubr.f32.mxu0 %v212
      %880 = vmatmul.mubr.f32.gmra.mrb[0].mxu0 %v211
      %v881 = vpop.f32.mrb[0].mxu0
      %v882 = vadd.f32 %v721, %v881
      %v883 = vpop.f32.mrb[0].mxu0
      %v884 = vadd.f32 %v723, %v883
      %885 = vmatprep.mubr.f32.mxu0 %v217
      %886 = vmatmul.mubr.f32.gmra.mrb[0].mxu0 %v216
      %v887 = vpop.f32.mrb[0].mxu0
      %v888 = vadd.f32 %v727, %v887
      %v889 = vpop.f32.mrb[0].mxu0
      %v890 = vadd.f32 %v729, %v889
      %891 = vmatprep.mubr.f32.mxu0 %v222
      %892 = vmatmul.mubr.f32.gmra.mrb[0].mxu0 %v221
      %v893 = vpop.f32.mrb[0].mxu0
      %v894 = vadd.f32 %v733, %v893
      %v895 = vpop.f32.mrb[0].mxu0
      %v896 = vadd.f32 %v735, %v895
      %897 = vmatprep.mubr.f32.mxu0 %v227
      %898 = vmatmul.mubr.f32.gmra.mrb[0].mxu0 %v226
      %v899 = vpop.f32.mrb[0].mxu0
      %v900 = vadd.f32 %v739, %v899
      %v901 = vpop.f32.mrb[0].mxu0
      %v902 = vadd.f32 %v741, %v901
      %903 = vmatprep.mubr.f32.mxu0 %v232
      %904 = vmatmul.mubr.f32.gmra.mrb[0].mxu0 %v231
      %v905 = vpop.f32.mrb[0].mxu0
      %v906 = vadd.f32 %v745, %v905
      %v907 = vpop.f32.mrb[0].mxu0
      %v908 = vadd.f32 %v747, %v907
      %909 = vmatprep.mubr.f32.mxu0 %v237
      %910 = vmatmul.mubr.f32.gmra.mrb[0].mxu0 %v236
      %v911 = vpop.f32.mrb[0].mxu0
      %v912 = vadd.f32 %v751, %v911
      %v913 = vpop.f32.mrb[0].mxu0
      %v914 = vadd.f32 %v753, %v913
      %915 = vmatprep.mubr.f32.mxu0 %v242
      %916 = vmatmul.mubr.f32.gmra.mrb[0].mxu0 %v241
      %v917 = vpop.f32.mrb[0].mxu0
      %v918 = vadd.f32 %v757, %v917
      %v919 = vpop.f32.mrb[0].mxu0
      %v920 = vadd.f32 %v759, %v919
      %921 = vmatprep.mubr.f32.mxu0 %v247
      %922 = vmatmul.mubr.f32.gmra.mrb[0].mxu0 %v246
      %v923 = vpop.f32.mrb[0].mxu0
      %v924 = vadd.f32 %v763, %v923
      %v925 = vpop.f32.mrb[0].mxu0
      %v926 = vadd.f32 %v765, %v925
      %927 = vmatprep.mubr.f32.mxu0 %v252
      %928 = vmatmul.mubr.f32.gmra.mrb[0].mxu0 %v251
      %v929 = vpop.f32.mrb[0].mxu0
      %v930 = vadd.f32 %v769, %v929
      %v931 = vpop.f32.mrb[0].mxu0
      %v932 = vadd.f32 %v771, %v931
      %933 = vmatprep.mubr.f32.mxu0 %v257
      %934 = vmatmul.mubr.f32.gmra.mrb[0].mxu0 %v256
      %v935 = vpop.f32.mrb[0].mxu0
      %v936 = vadd.f32 %v775, %v935
      %v937 = vpop.f32.mrb[0].mxu0
      %v938 = vadd.f32 %v777, %v937
      %939 = vdwg.mxu0
      %940 = vmatprep.subr.mxu0 %v516
      %941 = vmatpush1.msra.mxu0 %v515
      %942 = vmatprep.subr.mxu0 %v520
      %943 = vmatpush1.msra.mxu0 %v519
      %944 = vmatprep.subr.mxu0 %v524
      %945 = vmatpush1.msra.mxu0 %v523
      %946 = vmatprep.subr.mxu0 %v528
      %947 = vmatpush1.msra.mxu0 %v527
      %948 = vmatprep.subr.mxu0 %v532
      %949 = vmatpush1.msra.mxu0 %v531
      %950 = vmatprep.subr.mxu0 %v536
      %951 = vmatpush1.msra.mxu0 %v535
      %952 = vmatprep.subr.mxu0 %v540
      %953 = vmatpush1.msra.mxu0 %v539
      %954 = vmatprep.subr.mxu0 %v544
      %955 = vmatpush1.msra.mxu0 %v543
      %956 = vmatprep.subr.mxu0 0.0
      %957 = vmatpush1.msra.mxu0 0.0
      %958 = vmatprep.subr.mxu0 0.0
      %959 = vmatpush1.msra.mxu0 0.0
      %960 = vmatprep.subr.mxu0 0.0
      %961 = vmatpush1.msra.mxu0 0.0
      %962 = vmatprep.subr.mxu0 0.0
      %963 = vmatpush1.msra.mxu0 0.0
      %964 = vmatprep.subr.mxu0 0.0
      %965 = vmatpush1.msra.mxu0 0.0
      %966 = vmatprep.subr.mxu0 0.0
      %967 = vmatpush1.msra.mxu0 0.0
      %968 = vmatprep.subr.mxu0 0.0
      %969 = vmatpush1.msra.mxu0 0.0
      %970 = vmatprep.subr.mxu0 0.0
      %971 = vmatpush1.msra.mxu0 0.0
      %972 = vmatprep.subr.mxu0 0.0
      %973 = vmatpush1.msra.mxu0 0.0
      %974 = vmatprep.subr.mxu0 0.0
      %975 = vmatpush1.msra.mxu0 0.0
      %976 = vmatprep.subr.mxu0 0.0
      %977 = vmatpush1.msra.mxu0 0.0
      %978 = vmatprep.subr.mxu0 0.0
      %979 = vmatpush1.msra.mxu0 0.0
      %980 = vmatprep.subr.mxu0 0.0
      %981 = vmatpush1.msra.mxu0 0.0
      %982 = vmatprep.subr.mxu0 0.0
      %983 = vmatpush1.msra.mxu0 0.0
      %984 = vmatprep.subr.mxu0 0.0
      %985 = vmatpush1.msra.mxu0 0.0
      %986 = vmatprep.subr.mxu0 0.0
      %987 = vmatpush1.msra.mxu0 0.0
      %988 = vmatprep.subr.mxu0 0.0
      %989 = vmatpush1.msra.mxu0 0.0
      %990 = vmatprep.subr.mxu0 0.0
      %991 = vmatpush1.msra.mxu0 0.0
      %992 = vmatprep.subr.mxu0 0.0
      %993 = vmatpush1.msra.mxu0 0.0
      %994 = vmatprep.subr.mxu0 0.0
      %995 = vmatpush1.msra.mxu0 0.0
      %996 = vmatprep.subr.mxu0 0.0
      %997 = vmatpush1.msra.mxu0 0.0
      %998 = vmatprep.subr.mxu0 0.0
      %999 = vmatpush1.msra.mxu0 0.0
      %1000 = vmatprep.subr.mxu0 0.0
      %1001 = vmatpush1.msra.mxu0 0.0
      %1002 = vmatprep.subr.mxu0 0.0
      %1003 = vmatpush1.msra.mxu0 0.0
      %1004 = vmatprep.mubr.f32.mxu0 0.0
      %1005 = vmatmul.mubr.f32.gmra.mrb[0].mxu0 %v571
      %v1006 = vpop.f32.mrb[0].mxu0
      %v1007 = vadd.f32 %v846, %v1006
      %v1008 = vpop.f32.mrb[0].mxu0
      %v1009 = vadd.f32 %v848, %v1008
      %1010 = vmatprep.mubr.f32.mxu0 0.0
      %1011 = vmatmul.mubr.f32.gmra.mrb[0].mxu0 %v574
      %v1012 = vpop.f32.mrb[0].mxu0
      %v1013 = vadd.f32 %v852, %v1012
      %v1014 = vpop.f32.mrb[0].mxu0
      %v1015 = vadd.f32 %v854, %v1014
      %1016 = vmatprep.mubr.f32.mxu0 0.0
      %1017 = vmatmul.mubr.f32.gmra.mrb[0].mxu0 %v577
      %v1018 = vpop.f32.mrb[0].mxu0
      %v1019 = vadd.f32 %v858, %v1018
      %v1020 = vpop.f32.mrb[0].mxu0
      %v1021 = vadd.f32 %v860, %v1020
      %1022 = vmatprep.mubr.f32.mxu0 0.0
      %1023 = vmatmul.mubr.f32.gmra.mrb[0].mxu0 %v580
      %v1024 = vpop.f32.mrb[0].mxu0
      %v1025 = vadd.f32 %v864, %v1024
      %v1026 = vpop.f32.mrb[0].mxu0
      %v1027 = vadd.f32 %v866, %v1026
      %1028 = vmatprep.mubr.f32.mxu0 0.0
      %1029 = vmatmul.mubr.f32.gmra.mrb[0].mxu0 %v583
      %v1030 = vpop.f32.mrb[0].mxu0
      %v1031 = vadd.f32 %v870, %v1030
      %v1032 = vpop.f32.mrb[0].mxu0
      %v1033 = vadd.f32 %v872, %v1032
      %1034 = vmatprep.mubr.f32.mxu0 0.0
      %1035 = vmatmul.mubr.f32.gmra.mrb[0].mxu0 %v586
      %v1036 = vpop.f32.mrb[0].mxu0
      %v1037 = vadd.f32 %v876, %v1036
      %v1038 = vpop.f32.mrb[0].mxu0
      %v1039 = vadd.f32 %v878, %v1038
      %1040 = vmatprep.mubr.f32.mxu0 0.0
      %1041 = vmatmul.mubr.f32.gmra.mrb[0].mxu0 %v589
      %v1042 = vpop.f32.mrb[0].mxu0
      %v1043 = vadd.f32 %v882, %v1042
      %v1044 = vpop.f32.mrb[0].mxu0
      %v1045 = vadd.f32 %v884, %v1044
      %1046 = vmatprep.mubr.f32.mxu0 0.0
      %1047 = vmatmul.mubr.f32.gmra.mrb[0].mxu0 %v592
      %v1048 = vpop.f32.mrb[0].mxu0
      %v1049 = vadd.f32 %v888, %v1048
      %v1050 = vpop.f32.mrb[0].mxu0
      %v1051 = vadd.f32 %v890, %v1050
      %1052 = vmatprep.mubr.f32.mxu0 0.0
      %1053 = vmatmul.mubr.f32.gmra.mrb[0].mxu0 %v595
      %v1054 = vpop.f32.mrb[0].mxu0
      %v1055 = vadd.f32 %v894, %v1054
      %v1056 = vpop.f32.mrb[0].mxu0
      %v1057 = vadd.f32 %v896, %v1056
      %1058 = vmatprep.mubr.f32.mxu0 0.0
      %1059 = vmatmul.mubr.f32.gmra.mrb[0].mxu0 %v598
      %v1060 = vpop.f32.mrb[0].mxu0
      %v1061 = vadd.f32 %v900, %v1060
      %v1062 = vpop.f32.mrb[0].mxu0
      %v1063 = vadd.f32 %v902, %v1062
      %1064 = vmatprep.mubr.f32.mxu0 0.0
      %1065 = vmatmul.mubr.f32.gmra.mrb[0].mxu0 %v601
      %v1066 = vpop.f32.mrb[0].mxu0
      %v1067 = vadd.f32 %v906, %v1066
      %v1068 = vpop.f32.mrb[0].mxu0
      %v1069 = vadd.f32 %v908, %v1068
      %1070 = vmatprep.mubr.f32.mxu0 0.0
      %1071 = vmatmul.mubr.f32.gmra.mrb[0].mxu0 %v604
      %v1072 = vpop.f32.mrb[0].mxu0
      %v1073 = vadd.f32 %v912, %v1072
      %v1074 = vpop.f32.mrb[0].mxu0
      %v1075 = vadd.f32 %v914, %v1074
      %1076 = vmatprep.mubr.f32.mxu0 0.0
      %1077 = vmatmul.mubr.f32.gmra.mrb[0].mxu0 %v607
      %v1078 = vpop.f32.mrb[0].mxu0
      %v1079 = vadd.f32 %v918, %v1078
      %v1080 = vpop.f32.mrb[0].mxu0
      %v1081 = vadd.f32 %v920, %v1080
      %1082 = vmatprep.mubr.f32.mxu0 0.0
      %1083 = vmatmul.mubr.f32.gmra.mrb[0].mxu0 %v610
      %v1084 = vpop.f32.mrb[0].mxu0
      %v1085 = vadd.f32 %v924, %v1084
      %v1086 = vpop.f32.mrb[0].mxu0
      %v1087 = vadd.f32 %v926, %v1086
      %1088 = vmatprep.mubr.f32.mxu0 0.0
      %1089 = vmatmul.mubr.f32.gmra.mrb[0].mxu0 %v613
      %v1090 = vpop.f32.mrb[0].mxu0
      %v1091 = vadd.f32 %v930, %v1090
      %v1092 = vpop.f32.mrb[0].mxu0
      %v1093 = vadd.f32 %v932, %v1092
      %1094 = vmatprep.mubr.f32.mxu0 0.0
      %1095 = vmatmul.mubr.f32.gmra.mrb[0].mxu0 %v616
      %v1096 = vpop.f32.mrb[0].mxu0
      %v1097 = vadd.f32 %v936, %v1096
      %v1098 = vpop.f32.mrb[0].mxu0
      %v1099 = vadd.f32 %v938, %v1098
      %1100 = vdwg.mxu0
      %1101 = vmatprep.subr.mxu0 %v262
      %1102 = vmatpush1.msra.mxu0 %v261
      %1103 = vmatprep.subr.mxu0 %v266
      %1104 = vmatpush1.msra.mxu0 %v265
      %1105 = vmatprep.subr.mxu0 %v270
      %1106 = vmatpush1.msra.mxu0 %v269
      %1107 = vmatprep.subr.mxu0 %v274
      %1108 = vmatpush1.msra.mxu0 %v273
      %1109 = vmatprep.subr.mxu0 %v278
      %1110 = vmatpush1.msra.mxu0 %v277
      %1111 = vmatprep.subr.mxu0 %v282
      %1112 = vmatpush1.msra.mxu0 %v281
      %1113 = vmatprep.subr.mxu0 %v286
      %1114 = vmatpush1.msra.mxu0 %v285
      %1115 = vmatprep.subr.mxu0 %v290
      %1116 = vmatpush1.msra.mxu0 %v289
      %1117 = vmatprep.subr.mxu0 %v294
      %1118 = vmatpush1.msra.mxu0 %v293
      %1119 = vmatprep.subr.mxu0 %v298
      %1120 = vmatpush1.msra.mxu0 %v297
      %1121 = vmatprep.subr.mxu0 %v302
      %1122 = vmatpush1.msra.mxu0 %v301
      %1123 = vmatprep.subr.mxu0 %v306
      %1124 = vmatpush1.msra.mxu0 %v305
      %1125 = vmatprep.subr.mxu0 %v310
      %1126 = vmatpush1.msra.mxu0 %v309
      %1127 = vmatprep.subr.mxu0 %v314
      %1128 = vmatpush1.msra.mxu0 %v313
      %1129 = vmatprep.subr.mxu0 %v318
      %1130 = vmatpush1.msra.mxu0 %v317
      %1131 = vmatprep.subr.mxu0 %v322
      %1132 = vmatpush1.msra.mxu0 %v321
      %1133 = vmatprep.subr.mxu0 %v326
      %1134 = vmatpush1.msra.mxu0 %v325
      %1135 = vmatprep.subr.mxu0 %v330
      %1136 = vmatpush1.msra.mxu0 %v329
      %1137 = vmatprep.subr.mxu0 %v334
      %1138 = vmatpush1.msra.mxu0 %v333
      %1139 = vmatprep.subr.mxu0 %v338
      %1140 = vmatpush1.msra.mxu0 %v337
      %1141 = vmatprep.subr.mxu0 %v342
      %1142 = vmatpush1.msra.mxu0 %v341
      %1143 = vmatprep.subr.mxu0 %v346
      %1144 = vmatpush1.msra.mxu0 %v345
      %1145 = vmatprep.subr.mxu0 %v350
      %1146 = vmatpush1.msra.mxu0 %v349
      %1147 = vmatprep.subr.mxu0 %v354
      %1148 = vmatpush1.msra.mxu0 %v353
      %1149 = vmatprep.subr.mxu0 %v358
      %1150 = vmatpush1.msra.mxu0 %v357
      %1151 = vmatprep.subr.mxu0 %v362
      %1152 = vmatpush1.msra.mxu0 %v361
      %1153 = vmatprep.subr.mxu0 %v366
      %1154 = vmatpush1.msra.mxu0 %v365
      %1155 = vmatprep.subr.mxu0 %v370
      %1156 = vmatpush1.msra.mxu0 %v369
      %1157 = vmatprep.subr.mxu0 %v374
      %1158 = vmatpush1.msra.mxu0 %v373
      %1159 = vmatprep.subr.mxu0 %v378
      %1160 = vmatpush1.msra.mxu0 %v377
      %1161 = vmatprep.subr.mxu0 %v382
      %1162 = vmatpush1.msra.mxu0 %v381
      %1163 = vmatprep.subr.mxu0 %v386
      %1164 = vmatpush1.msra.mxu0 %v385
      %1165 = vmatprep.mubr.f32.mxu0 %v180
      %1166 = vmatmul.mubr.f32.gmra.mrb[0].mxu0 %v179
      %v1167 = vpop.f32.mrb[0].mxu0
      %v1168 = vadd.f32 %v560, %v1167
      %v1169 = vpop.f32.mrb[0].mxu0
      %v1170 = vadd.f32 %v564, %v1169
      %1171 = vmatprep.mubr.f32.mxu0 %v185
      %1172 = vmatmul.mubr.f32.gmra.mrb[0].mxu0 %v184
      %v1173 = vpop.f32.mrb[0].mxu0
      %v1174 = vadd.f32 %v560, %v1173
      %v1175 = vpop.f32.mrb[0].mxu0
      %v1176 = vadd.f32 %v564, %v1175
      %1177 = vmatprep.mubr.f32.mxu0 %v190
      %1178 = vmatmul.mubr.f32.gmra.mrb[0].mxu0 %v189
      %v1179 = vpop.f32.mrb[0].mxu0
      %v1180 = vadd.f32 %v560, %v1179
      %v1181 = vpop.f32.mrb[0].mxu0
      %v1182 = vadd.f32 %v564, %v1181
      %1183 = vmatprep.mubr.f32.mxu0 %v195
      %1184 = vmatmul.mubr.f32.gmra.mrb[0].mxu0 %v194
      %v1185 = vpop.f32.mrb[0].mxu0
      %v1186 = vadd.f32 %v560, %v1185
      %v1187 = vpop.f32.mrb[0].mxu0
      %v1188 = vadd.f32 %v564, %v1187
      %1189 = vmatprep.mubr.f32.mxu0 %v200
      %1190 = vmatmul.mubr.f32.gmra.mrb[0].mxu0 %v199
      %v1191 = vpop.f32.mrb[0].mxu0
      %v1192 = vadd.f32 %v560, %v1191
      %v1193 = vpop.f32.mrb[0].mxu0
      %v1194 = vadd.f32 %v564, %v1193
      %1195 = vmatprep.mubr.f32.mxu0 %v205
      %1196 = vmatmul.mubr.f32.gmra.mrb[0].mxu0 %v204
      %v1197 = vpop.f32.mrb[0].mxu0
      %v1198 = vadd.f32 %v560, %v1197
      %v1199 = vpop.f32.mrb[0].mxu0
      %v1200 = vadd.f32 %v564, %v1199
      %1201 = vmatprep.mubr.f32.mxu0 %v210
      %1202 = vmatmul.mubr.f32.gmra.mrb[0].mxu0 %v209
      %v1203 = vpop.f32.mrb[0].mxu0
      %v1204 = vadd.f32 %v560, %v1203
      %v1205 = vpop.f32.mrb[0].mxu0
      %v1206 = vadd.f32 %v564, %v1205
      %1207 = vmatprep.mubr.f32.mxu0 %v215
      %1208 = vmatmul.mubr.f32.gmra.mrb[0].mxu0 %v214
      %v1209 = vpop.f32.mrb[0].mxu0
      %v1210 = vadd.f32 %v560, %v1209
      %v1211 = vpop.f32.mrb[0].mxu0
      %v1212 = vadd.f32 %v564, %v1211
      %1213 = vmatprep.mubr.f32.mxu0 %v220
      %1214 = vmatmul.mubr.f32.gmra.mrb[0].mxu0 %v219
      %v1215 = vpop.f32.mrb[0].mxu0
      %v1216 = vadd.f32 %v560, %v1215
      %v1217 = vpop.f32.mrb[0].mxu0
      %v1218 = vadd.f32 %v564, %v1217
      %1219 = vmatprep.mubr.f32.mxu0 %v225
      %1220 = vmatmul.mubr.f32.gmra.mrb[0].mxu0 %v224
      %v1221 = vpop.f32.mrb[0].mxu0
      %v1222 = vadd.f32 %v560, %v1221
      %v1223 = vpop.f32.mrb[0].mxu0
      %v1224 = vadd.f32 %v564, %v1223
      %1225 = vmatprep.mubr.f32.mxu0 %v230
      %1226 = vmatmul.mubr.f32.gmra.mrb[0].mxu0 %v229
      %v1227 = vpop.f32.mrb[0].mxu0
      %v1228 = vadd.f32 %v560, %v1227
      %v1229 = vpop.f32.mrb[0].mxu0
      %v1230 = vadd.f32 %v564, %v1229
      %1231 = vmatprep.mubr.f32.mxu0 %v235
      %1232 = vmatmul.mubr.f32.gmra.mrb[0].mxu0 %v234
      %v1233 = vpop.f32.mrb[0].mxu0
      %v1234 = vadd.f32 %v560, %v1233
      %v1235 = vpop.f32.mrb[0].mxu0
      %v1236 = vadd.f32 %v564, %v1235
      %1237 = vmatprep.mubr.f32.mxu0 %v240
      %1238 = vmatmul.mubr.f32.gmra.mrb[0].mxu0 %v239
      %v1239 = vpop.f32.mrb[0].mxu0
      %v1240 = vadd.f32 %v560, %v1239
      %v1241 = vpop.f32.mrb[0].mxu0
      %v1242 = vadd.f32 %v564, %v1241
      %1243 = vmatprep.mubr.f32.mxu0 %v245
      %1244 = vmatmul.mubr.f32.gmra.mrb[0].mxu0 %v244
      %v1245 = vpop.f32.mrb[0].mxu0
      %v1246 = vadd.f32 %v560, %v1245
      %v1247 = vpop.f32.mrb[0].mxu0
      %v1248 = vadd.f32 %v564, %v1247
      %1249 = vmatprep.mubr.f32.mxu0 %v250
      %1250 = vmatmul.mubr.f32.gmra.mrb[0].mxu0 %v249
      %v1251 = vpop.f32.mrb[0].mxu0
      %v1252 = vadd.f32 %v560, %v1251
      %v1253 = vpop.f32.mrb[0].mxu0
      %v1254 = vadd.f32 %v564, %v1253
      %1255 = vmatprep.mubr.f32.mxu0 %v255
      %1256 = vmatmul.mubr.f32.gmra.mrb[0].mxu0 %v254
      %v1257 = vpop.f32.mrb[0].mxu0
      %v1258 = vadd.f32 %v560, %v1257
      %v1259 = vpop.f32.mrb[0].mxu0
      %v1260 = vadd.f32 %v564, %v1259
      %1261 = vdwg.mxu0
      %1262 = vmatprep.subr.mxu0 %v390
      %1263 = vmatpush1.msra.mxu0 %v389
      %1264 = vmatprep.subr.mxu0 %v394
      %1265 = vmatpush1.msra.mxu0 %v393
      %1266 = vmatprep.subr.mxu0 %v398
      %1267 = vmatpush1.msra.mxu0 %v397
      %1268 = vmatprep.subr.mxu0 %v402
      %1269 = vmatpush1.msra.mxu0 %v401
      %1270 = vmatprep.subr.mxu0 %v406
      %1271 = vmatpush1.msra.mxu0 %v405
      %1272 = vmatprep.subr.mxu0 %v410
      %1273 = vmatpush1.msra.mxu0 %v409
      %1274 = vmatprep.subr.mxu0 %v414
      %1275 = vmatpush1.msra.mxu0 %v413
      %1276 = vmatprep.subr.mxu0 %v418
      %1277 = vmatpush1.msra.mxu0 %v417
      %1278 = vmatprep.subr.mxu0 %v422
      %1279 = vmatpush1.msra.mxu0 %v421
      %1280 = vmatprep.subr.mxu0 %v426
      %1281 = vmatpush1.msra.mxu0 %v425
      %1282 = vmatprep.subr.mxu0 %v430
      %1283 = vmatpush1.msra.mxu0 %v429
      %1284 = vmatprep.subr.mxu0 %v434
      %1285 = vmatpush1.msra.mxu0 %v433
      %1286 = vmatprep.subr.mxu0 %v438
      %1287 = vmatpush1.msra.mxu0 %v437
      %1288 = vmatprep.subr.mxu0 %v442
      %1289 = vmatpush1.msra.mxu0 %v441
      %1290 = vmatprep.subr.mxu0 %v446
      %1291 = vmatpush1.msra.mxu0 %v445
      %1292 = vmatprep.subr.mxu0 %v450
      %1293 = vmatpush1.msra.mxu0 %v449
      %1294 = vmatprep.subr.mxu0 %v454
      %1295 = vmatpush1.msra.mxu0 %v453
      %1296 = vmatprep.subr.mxu0 %v458
      %1297 = vmatpush1.msra.mxu0 %v457
      %1298 = vmatprep.subr.mxu0 %v462
      %1299 = vmatpush1.msra.mxu0 %v461
      %1300 = vmatprep.subr.mxu0 %v466
      %1301 = vmatpush1.msra.mxu0 %v465
      %1302 = vmatprep.subr.mxu0 %v470
      %1303 = vmatpush1.msra.mxu0 %v469
      %1304 = vmatprep.subr.mxu0 %v474
      %1305 = vmatpush1.msra.mxu0 %v473
      %1306 = vmatprep.subr.mxu0 %v478
      %1307 = vmatpush1.msra.mxu0 %v477
      %1308 = vmatprep.subr.mxu0 %v482
      %1309 = vmatpush1.msra.mxu0 %v481
      %1310 = vmatprep.subr.mxu0 %v486
      %1311 = vmatpush1.msra.mxu0 %v485
      %1312 = vmatprep.subr.mxu0 %v490
      %1313 = vmatpush1.msra.mxu0 %v489
      %1314 = vmatprep.subr.mxu0 %v494
      %1315 = vmatpush1.msra.mxu0 %v493
      %1316 = vmatprep.subr.mxu0 %v498
      %1317 = vmatpush1.msra.mxu0 %v497
      %1318 = vmatprep.subr.mxu0 %v502
      %1319 = vmatpush1.msra.mxu0 %v501
      %1320 = vmatprep.subr.mxu0 %v506
      %1321 = vmatpush1.msra.mxu0 %v505
      %1322 = vmatprep.subr.mxu0 %v510
      %1323 = vmatpush1.msra.mxu0 %v509
      %1324 = vmatprep.subr.mxu0 %v514
      %1325 = vmatpush1.msra.mxu0 %v513
      %1326 = vmatprep.mubr.f32.mxu0 %v182
      %1327 = vmatmul.mubr.f32.gmra.mrb[0].mxu0 %v181
      %v1328 = vpop.f32.mrb[0].mxu0
      %v1329 = vadd.f32 %v1168, %v1328
      %v1330 = vpop.f32.mrb[0].mxu0
      %v1331 = vadd.f32 %v1170, %v1330
      %1332 = vmatprep.mubr.f32.mxu0 %v187
      %1333 = vmatmul.mubr.f32.gmra.mrb[0].mxu0 %v186
      %v1334 = vpop.f32.mrb[0].mxu0
      %v1335 = vadd.f32 %v1174, %v1334
      %v1336 = vpop.f32.mrb[0].mxu0
      %v1337 = vadd.f32 %v1176, %v1336
      %1338 = vmatprep.mubr.f32.mxu0 %v192
      %1339 = vmatmul.mubr.f32.gmra.mrb[0].mxu0 %v191
      %v1340 = vpop.f32.mrb[0].mxu0
      %v1341 = vadd.f32 %v1180, %v1340
      %v1342 = vpop.f32.mrb[0].mxu0
      %v1343 = vadd.f32 %v1182, %v1342
      %1344 = vmatprep.mubr.f32.mxu0 %v197
      %1345 = vmatmul.mubr.f32.gmra.mrb[0].mxu0 %v196
      %v1346 = vpop.f32.mrb[0].mxu0
      %v1347 = vadd.f32 %v1186, %v1346
      %v1348 = vpop.f32.mrb[0].mxu0
      %v1349 = vadd.f32 %v1188, %v1348
      %1350 = vmatprep.mubr.f32.mxu0 %v202
      %1351 = vmatmul.mubr.f32.gmra.mrb[0].mxu0 %v201
      %v1352 = vpop.f32.mrb[0].mxu0
      %v1353 = vadd.f32 %v1192, %v1352
      %v1354 = vpop.f32.mrb[0].mxu0
      %v1355 = vadd.f32 %v1194, %v1354
      %1356 = vmatprep.mubr.f32.mxu0 %v207
      %1357 = vmatmul.mubr.f32.gmra.mrb[0].mxu0 %v206
      %v1358 = vpop.f32.mrb[0].mxu0
      %v1359 = vadd.f32 %v1198, %v1358
      %v1360 = vpop.f32.mrb[0].mxu0
      %v1361 = vadd.f32 %v1200, %v1360
      %1362 = vmatprep.mubr.f32.mxu0 %v212
      %1363 = vmatmul.mubr.f32.gmra.mrb[0].mxu0 %v211
      %v1364 = vpop.f32.mrb[0].mxu0
      %v1365 = vadd.f32 %v1204, %v1364
      %v1366 = vpop.f32.mrb[0].mxu0
      %v1367 = vadd.f32 %v1206, %v1366
      %1368 = vmatprep.mubr.f32.mxu0 %v217
      %1369 = vmatmul.mubr.f32.gmra.mrb[0].mxu0 %v216
      %v1370 = vpop.f32.mrb[0].mxu0
      %v1371 = vadd.f32 %v1210, %v1370
      %v1372 = vpop.f32.mrb[0].mxu0
      %v1373 = vadd.f32 %v1212, %v1372
      %1374 = vmatprep.mubr.f32.mxu0 %v222
      %1375 = vmatmul.mubr.f32.gmra.mrb[0].mxu0 %v221
      %v1376 = vpop.f32.mrb[0].mxu0
      %v1377 = vadd.f32 %v1216, %v1376
      %v1378 = vpop.f32.mrb[0].mxu0
      %v1379 = vadd.f32 %v1218, %v1378
      %1380 = vmatprep.mubr.f32.mxu0 %v227
      %1381 = vmatmul.mubr.f32.gmra.mrb[0].mxu0 %v226
      %v1382 = vpop.f32.mrb[0].mxu0
      %v1383 = vadd.f32 %v1222, %v1382
      %v1384 = vpop.f32.mrb[0].mxu0
      %v1385 = vadd.f32 %v1224, %v1384
      %1386 = vmatprep.mubr.f32.mxu0 %v232
      %1387 = vmatmul.mubr.f32.gmra.mrb[0].mxu0 %v231
      %v1388 = vpop.f32.mrb[0].mxu0
      %v1389 = vadd.f32 %v1228, %v1388
      %v1390 = vpop.f32.mrb[0].mxu0
      %v1391 = vadd.f32 %v1230, %v1390
      %1392 = vmatprep.mubr.f32.mxu0 %v237
      %1393 = vmatmul.mubr.f32.gmra.mrb[0].mxu0 %v236
      %v1394 = vpop.f32.mrb[0].mxu0
      %v1395 = vadd.f32 %v1234, %v1394
      %v1396 = vpop.f32.mrb[0].mxu0
      %v1397 = vadd.f32 %v1236, %v1396
      %1398 = vmatprep.mubr.f32.mxu0 %v242
      %1399 = vmatmul.mubr.f32.gmra.mrb[0].mxu0 %v241
      %v1400 = vpop.f32.mrb[0].mxu0
      %v1401 = vadd.f32 %v1240, %v1400
      %v1402 = vpop.f32.mrb[0].mxu0
      %v1403 = vadd.f32 %v1242, %v1402
      %1404 = vmatprep.mubr.f32.mxu0 %v247
      %1405 = vmatmul.mubr.f32.gmra.mrb[0].mxu0 %v246
      %v1406 = vpop.f32.mrb[0].mxu0
      %v1407 = vadd.f32 %v1246, %v1406
      %v1408 = vpop.f32.mrb[0].mxu0
      %v1409 = vadd.f32 %v1248, %v1408
      %1410 = vmatprep.mubr.f32.mxu0 %v252
      %1411 = vmatmul.mubr.f32.gmra.mrb[0].mxu0 %v251
      %v1412 = vpop.f32.mrb[0].mxu0
      %v1413 = vadd.f32 %v1252, %v1412
      %v1414 = vpop.f32.mrb[0].mxu0
      %v1415 = vadd.f32 %v1254, %v1414
      %1416 = vmatprep.mubr.f32.mxu0 %v257
      %1417 = vmatmul.mubr.f32.gmra.mrb[0].mxu0 %v256
      %v1418 = vpop.f32.mrb[0].mxu0
      %v1419 = vadd.f32 %v1258, %v1418
      %v1420 = vpop.f32.mrb[0].mxu0
      %v1421 = vadd.f32 %v1260, %v1420
      %1422 = vdwg.mxu0
      %1423 = vmatprep.subr.mxu0 %v518
      %1424 = vmatpush1.msra.mxu0 %v517
      %1425 = vmatprep.subr.mxu0 %v522
      %1426 = vmatpush1.msra.mxu0 %v521
      %1427 = vmatprep.subr.mxu0 %v526
      %1428 = vmatpush1.msra.mxu0 %v525
      %1429 = vmatprep.subr.mxu0 %v530
      %1430 = vmatpush1.msra.mxu0 %v529
      %1431 = vmatprep.subr.mxu0 %v534
      %1432 = vmatpush1.msra.mxu0 %v533
      %1433 = vmatprep.subr.mxu0 %v538
      %1434 = vmatpush1.msra.mxu0 %v537
      %1435 = vmatprep.subr.mxu0 %v542
      %1436 = vmatpush1.msra.mxu0 %v541
      %1437 = vmatprep.subr.mxu0 %v546
      %1438 = vmatpush1.msra.mxu0 %v545
      %1439 = vmatprep.subr.mxu0 0.0
      %1440 = vmatpush1.msra.mxu0 0.0
      %1441 = vmatprep.subr.mxu0 0.0
      %1442 = vmatpush1.msra.mxu0 0.0
      %1443 = vmatprep.subr.mxu0 0.0
      %1444 = vmatpush1.msra.mxu0 0.0
      %1445 = vmatprep.subr.mxu0 0.0
      %1446 = vmatpush1.msra.mxu0 0.0
      %1447 = vmatprep.subr.mxu0 0.0
      %1448 = vmatpush1.msra.mxu0 0.0
      %1449 = vmatprep.subr.mxu0 0.0
      %1450 = vmatpush1.msra.mxu0 0.0
      %1451 = vmatprep.subr.mxu0 0.0
      %1452 = vmatpush1.msra.mxu0 0.0
      %1453 = vmatprep.subr.mxu0 0.0
      %1454 = vmatpush1.msra.mxu0 0.0
      %1455 = vmatprep.subr.mxu0 0.0
      %1456 = vmatpush1.msra.mxu0 0.0
      %1457 = vmatprep.subr.mxu0 0.0
      %1458 = vmatpush1.msra.mxu0 0.0
      %1459 = vmatprep.subr.mxu0 0.0
      %1460 = vmatpush1.msra.mxu0 0.0
      %1461 = vmatprep.subr.mxu0 0.0
      %1462 = vmatpush1.msra.mxu0 0.0
      %1463 = vmatprep.subr.mxu0 0.0
      %1464 = vmatpush1.msra.mxu0 0.0
      %1465 = vmatprep.subr.mxu0 0.0
      %1466 = vmatpush1.msra.mxu0 0.0
      %1467 = vmatprep.subr.mxu0 0.0
      %1468 = vmatpush1.msra.mxu0 0.0
      %1469 = vmatprep.subr.mxu0 0.0
      %1470 = vmatpush1.msra.mxu0 0.0
      %1471 = vmatprep.subr.mxu0 0.0
      %1472 = vmatpush1.msra.mxu0 0.0
      %1473 = vmatprep.subr.mxu0 0.0
      %1474 = vmatpush1.msra.mxu0 0.0
      %1475 = vmatprep.subr.mxu0 0.0
      %1476 = vmatpush1.msra.mxu0 0.0
      %1477 = vmatprep.subr.mxu0 0.0
      %1478 = vmatpush1.msra.mxu0 0.0
      %1479 = vmatprep.subr.mxu0 0.0
      %1480 = vmatpush1.msra.mxu0 0.0
      %1481 = vmatprep.subr.mxu0 0.0
      %1482 = vmatpush1.msra.mxu0 0.0
      %1483 = vmatprep.subr.mxu0 0.0
      %1484 = vmatpush1.msra.mxu0 0.0
      %1485 = vmatprep.subr.mxu0 0.0
      %1486 = vmatpush1.msra.mxu0 0.0
      %1487 = vmatprep.mubr.f32.mxu0 0.0
      %1488 = vmatmul.mubr.f32.gmra.mrb[0].mxu0 %v571
      %v1489 = vpop.f32.mrb[0].mxu0
      %v1490 = vadd.f32 %v1329, %v1489
      %v1491 = vpop.f32.mrb[0].mxu0
      %v1492 = vadd.f32 %v1331, %v1491
      %1493 = vmatprep.mubr.f32.mxu0 0.0
      %1494 = vmatmul.mubr.f32.gmra.mrb[0].mxu0 %v574
      %v1495 = vpop.f32.mrb[0].mxu0
      %v1496 = vadd.f32 %v1335, %v1495
      %v1497 = vpop.f32.mrb[0].mxu0
      %v1498 = vadd.f32 %v1337, %v1497
      %1499 = vmatprep.mubr.f32.mxu0 0.0
      %1500 = vmatmul.mubr.f32.gmra.mrb[0].mxu0 %v577
      %v1501 = vpop.f32.mrb[0].mxu0
      %v1502 = vadd.f32 %v1341, %v1501
      %v1503 = vpop.f32.mrb[0].mxu0
      %v1504 = vadd.f32 %v1343, %v1503
      %1505 = vmatprep.mubr.f32.mxu0 0.0
      %1506 = vmatmul.mubr.f32.gmra.mrb[0].mxu0 %v580
      %v1507 = vpop.f32.mrb[0].mxu0
      %v1508 = vadd.f32 %v1347, %v1507
      %v1509 = vpop.f32.mrb[0].mxu0
      %v1510 = vadd.f32 %v1349, %v1509
      %1511 = vmatprep.mubr.f32.mxu0 0.0
      %1512 = vmatmul.mubr.f32.gmra.mrb[0].mxu0 %v583
      %v1513 = vpop.f32.mrb[0].mxu0
      %v1514 = vadd.f32 %v1353, %v1513
      %v1515 = vpop.f32.mrb[0].mxu0
      %v1516 = vadd.f32 %v1355, %v1515
      %1517 = vmatprep.mubr.f32.mxu0 0.0
      %1518 = vmatmul.mubr.f32.gmra.mrb[0].mxu0 %v586
      %v1519 = vpop.f32.mrb[0].mxu0
      %v1520 = vadd.f32 %v1359, %v1519
      %v1521 = vpop.f32.mrb[0].mxu0
      %v1522 = vadd.f32 %v1361, %v1521
      %1523 = vmatprep.mubr.f32.mxu0 0.0
      %1524 = vmatmul.mubr.f32.gmra.mrb[0].mxu0 %v589
      %v1525 = vpop.f32.mrb[0].mxu0
      %v1526 = vadd.f32 %v1365, %v1525
      %v1527 = vpop.f32.mrb[0].mxu0
      %v1528 = vadd.f32 %v1367, %v1527
      %1529 = vmatprep.mubr.f32.mxu0 0.0
      %1530 = vmatmul.mubr.f32.gmra.mrb[0].mxu0 %v592
      %v1531 = vpop.f32.mrb[0].mxu0
      %v1532 = vadd.f32 %v1371, %v1531
      %v1533 = vpop.f32.mrb[0].mxu0
      %v1534 = vadd.f32 %v1373, %v1533
      %1535 = vmatprep.mubr.f32.mxu0 0.0
      %1536 = vmatmul.mubr.f32.gmra.mrb[0].mxu0 %v595
      %v1537 = vpop.f32.mrb[0].mxu0
      %v1538 = vadd.f32 %v1377, %v1537
      %v1539 = vpop.f32.mrb[0].mxu0
      %v1540 = vadd.f32 %v1379, %v1539
      %1541 = vmatprep.mubr.f32.mxu0 0.0
      %1542 = vmatmul.mubr.f32.gmra.mrb[0].mxu0 %v598
      %v1543 = vpop.f32.mrb[0].mxu0
      %v1544 = vadd.f32 %v1383, %v1543
      %v1545 = vpop.f32.mrb[0].mxu0
      %v1546 = vadd.f32 %v1385, %v1545
      %1547 = vmatprep.mubr.f32.mxu0 0.0
      %1548 = vmatmul.mubr.f32.gmra.mrb[0].mxu0 %v601
      %v1549 = vpop.f32.mrb[0].mxu0
      %v1550 = vadd.f32 %v1389, %v1549
      %v1551 = vpop.f32.mrb[0].mxu0
      %v1552 = vadd.f32 %v1391, %v1551
      %1553 = vmatprep.mubr.f32.mxu0 0.0
      %1554 = vmatmul.mubr.f32.gmra.mrb[0].mxu0 %v604
      %v1555 = vpop.f32.mrb[0].mxu0
      %v1556 = vadd.f32 %v1395, %v1555
      %v1557 = vpop.f32.mrb[0].mxu0
      %v1558 = vadd.f32 %v1397, %v1557
      %1559 = vmatprep.mubr.f32.mxu0 0.0
      %1560 = vmatmul.mubr.f32.gmra.mrb[0].mxu0 %v607
      %v1561 = vpop.f32.mrb[0].mxu0
      %v1562 = vadd.f32 %v1401, %v1561
      %v1563 = vpop.f32.mrb[0].mxu0
      %v1564 = vadd.f32 %v1403, %v1563
      %1565 = vmatprep.mubr.f32.mxu0 0.0
      %1566 = vmatmul.mubr.f32.gmra.mrb[0].mxu0 %v610
      %v1567 = vpop.f32.mrb[0].mxu0
      %v1568 = vadd.f32 %v1407, %v1567
      %v1569 = vpop.f32.mrb[0].mxu0
      %v1570 = vadd.f32 %v1409, %v1569
      %1571 = vmatprep.mubr.f32.mxu0 0.0
      %1572 = vmatmul.mubr.f32.gmra.mrb[0].mxu0 %v613
      %v1573 = vpop.f32.mrb[0].mxu0
      %v1574 = vadd.f32 %v1413, %v1573
      %v1575 = vpop.f32.mrb[0].mxu0
      %v1576 = vadd.f32 %v1415, %v1575
      %1577 = vmatprep.mubr.f32.mxu0 0.0
      %1578 = vmatmul.mubr.f32.gmra.mrb[0].mxu0 %v616
      %v1579 = vpop.f32.mrb[0].mxu0
      %v1580 = vadd.f32 %v1419, %v1579
      %v1581 = vpop.f32.mrb[0].mxu0
      %v1582 = vadd.f32 %v1421, %v1581
      %1583 = vdwg.mxu0
      %v1584 = vmax.f32 %v1007, 0.0
      %v1585 = vmax.f32 %v1009, 0.0
      %v1586 = vmax.f32 %v1490, 0.0
      %v1587 = vmax.f32 %v1492, 0.0
      %v1588 = vmax.f32 %v1013, 0.0
      %v1589 = vmax.f32 %v1015, 0.0
      %v1590 = vmax.f32 %v1496, 0.0
      %v1591 = vmax.f32 %v1498, 0.0
      %v1592 = vmax.f32 %v1019, 0.0
      %v1593 = vmax.f32 %v1021, 0.0
      %v1594 = vmax.f32 %v1502, 0.0
      %v1595 = vmax.f32 %v1504, 0.0
      %v1596 = vmax.f32 %v1025, 0.0
      %v1597 = vmax.f32 %v1027, 0.0
      %v1598 = vmax.f32 %v1508, 0.0
      %v1599 = vmax.f32 %v1510, 0.0
      %v1600 = vmax.f32 %v1031, 0.0
      %v1601 = vmax.f32 %v1033, 0.0
      %v1602 = vmax.f32 %v1514, 0.0
      %v1603 = vmax.f32 %v1516, 0.0
      %v1604 = vmax.f32 %v1037, 0.0
      %v1605 = vmax.f32 %v1039, 0.0
      %v1606 = vmax.f32 %v1520, 0.0
      %v1607 = vmax.f32 %v1522, 0.0
      %v1608 = vmax.f32 %v1043, 0.0
      %v1609 = vmax.f32 %v1045, 0.0
      %v1610 = vmax.f32 %v1526, 0.0
      %v1611 = vmax.f32 %v1528, 0.0
      %v1612 = vmax.f32 %v1049, 0.0
      %v1613 = vmax.f32 %v1051, 0.0
      %v1614 = vmax.f32 %v1532, 0.0
      %v1615 = vmax.f32 %v1534, 0.0
      %v1616 = vmax.f32 %v1055, 0.0
      %v1617 = vmax.f32 %v1057, 0.0
      %v1618 = vmax.f32 %v1538, 0.0
      %v1619 = vmax.f32 %v1540, 0.0
      %v1620 = vmax.f32 %v1061, 0.0
      %v1621 = vmax.f32 %v1063, 0.0
      %v1622 = vmax.f32 %v1544, 0.0
      %v1623 = vmax.f32 %v1546, 0.0
      %v1624 = vmax.f32 %v1067, 0.0
      %v1625 = vmax.f32 %v1069, 0.0
      %v1626 = vmax.f32 %v1550, 0.0
      %v1627 = vmax.f32 %v1552, 0.0
      %v1628 = vmax.f32 %v1073, 0.0
      %v1629 = vmax.f32 %v1075, 0.0
      %v1630 = vmax.f32 %v1556, 0.0
      %v1631 = vmax.f32 %v1558, 0.0
      %v1632 = vmax.f32 %v1079, 0.0
      %v1633 = vmax.f32 %v1081, 0.0
      %v1634 = vmax.f32 %v1562, 0.0
      %v1635 = vmax.f32 %v1564, 0.0
      %v1636 = vmax.f32 %v1085, 0.0
      %v1637 = vmax.f32 %v1087, 0.0
      %v1638 = vmax.f32 %v1568, 0.0
      %v1639 = vmax.f32 %v1570, 0.0
      %v1640 = vmax.f32 %v1091, 0.0
      %v1641 = vmax.f32 %v1093, 0.0
      %v1642 = vmax.f32 %v1574, 0.0
      %v1643 = vmax.f32 %v1576, 0.0
      %v1644 = vmax.f32 %v1097, 0.0
      %v1645 = vmax.f32 %v1099, 0.0
      %v1646 = vmax.f32 %v1580, 0.0
      %v1647 = vmax.f32 %v1582, 0.0
      %1648 = vst [vmem:[%s177] sm:$0xff] %v1584
      %1649 = vst [vmem:[%s177 + $0x8] sm:$0xff] %v1585
      %1650 = vst [vmem:[%s177 + $0x10] sm:$0xff] %v1586
      %1651 = vst [vmem:[%s177 + $0x18] sm:$0xff] %v1587
      %1652 = vst [vmem:[%s177 + $0x20] sm:$0xff] %v1588
      %1653 = vst [vmem:[%s177 + $0x28] sm:$0xff] %v1589
      %1654 = vst [vmem:[%s177 + $0x30] sm:$0xff] %v1590
      %1655 = vst [vmem:[%s177 + $0x38] sm:$0xff] %v1591
      %1656 = vst [vmem:[%s177 + $0x40] sm:$0xff] %v1592
      %1657 = vst [vmem:[%s177 + $0x48] sm:$0xff] %v1593
      %1658 = vst [vmem:[%s177 + $0x50] sm:$0xff] %v1594
      %1659 = vst [vmem:[%s177 + $0x58] sm:$0xff] %v1595
      %1660 = vst [vmem:[%s177 + $0x60] sm:$0xff] %v1596
      %1661 = vst [vmem:[%s177 + $0x68] sm:$0xff] %v1597
      %1662 = vst [vmem:[%s177 + $0x70] sm:$0xff] %v1598
      %1663 = vst [vmem:[%s177 + $0x78] sm:$0xff] %v1599
      %1664 = vst [vmem:[%s177 + $0x80] sm:$0xff] %v1600
      %1665 = vst [vmem:[%s177 + $0x88] sm:$0xff] %v1601
      %1666 = vst [vmem:[%s177 + $0x90] sm:$0xff] %v1602
      %1667 = vst [vmem:[%s177 + $0x98] sm:$0xff] %v1603
      %1668 = vst [vmem:[%s177 + $0xa0] sm:$0xff] %v1604
      %1669 = vst [vmem:[%s177 + $0xa8] sm:$0xff] %v1605
      %1670 = vst [vmem:[%s177 + $0xb0] sm:$0xff] %v1606
      %1671 = vst [vmem:[%s177 + $0xb8] sm:$0xff] %v1607
      %1672 = vst [vmem:[%s177 + $0xc0] sm:$0xff] %v1608
      %1673 = vst [vmem:[%s177 + $0xc8] sm:$0xff] %v1609
      %1674 = vst [vmem:[%s177 + $0xd0] sm:$0xff] %v1610
      %1675 = vst [vmem:[%s177 + $0xd8] sm:$0xff] %v1611
      %1676 = vst [vmem:[%s177 + $0xe0] sm:$0xff] %v1612
      %1677 = vst [vmem:[%s177 + $0xe8] sm:$0xff] %v1613
      %1678 = vst [vmem:[%s177 + $0xf0] sm:$0xff] %v1614
      %1679 = vst [vmem:[%s177 + $0xf8] sm:$0xff] %v1615
      %1680 = vst [vmem:[%s177 + $0x100] sm:$0xff] %v1616
      %1681 = vst [vmem:[%s177 + $0x108] sm:$0xff] %v1617
      %1682 = vst [vmem:[%s177 + $0x110] sm:$0xff] %v1618
      %1683 = vst [vmem:[%s177 + $0x118] sm:$0xff] %v1619
      %1684 = vst [vmem:[%s177 + $0x120] sm:$0xff] %v1620
      %1685 = vst [vmem:[%s177 + $0x128] sm:$0xff] %v1621
      %1686 = vst [vmem:[%s177 + $0x130] sm:$0xff] %v1622
      %1687 = vst [vmem:[%s177 + $0x138] sm:$0xff] %v1623
      %1688 = vst [vmem:[%s177 + $0x140] sm:$0xff] %v1624
      %1689 = vst [vmem:[%s177 + $0x148] sm:$0xff] %v1625
      %1690 = vst [vmem:[%s177 + $0x150] sm:$0xff] %v1626
      %1691 = vst [vmem:[%s177 + $0x158] sm:$0xff] %v1627
      %1692 = vst [vmem:[%s177 + $0x160] sm:$0xff] %v1628
      %1693 = vst [vmem:[%s177 + $0x168] sm:$0xff] %v1629
      %1694 = vst [vmem:[%s177 + $0x170] sm:$0xff] %v1630
      %1695 = vst [vmem:[%s177 + $0x178] sm:$0xff] %v1631
      %1696 = vst [vmem:[%s177 + $0x180] sm:$0xff] %v1632
      %1697 = vst [vmem:[%s177 + $0x188] sm:$0xff] %v1633
      %1698 = vst [vmem:[%s177 + $0x190] sm:$0xff] %v1634
      %1699 = vst [vmem:[%s177 + $0x198] sm:$0xff] %v1635
      %1700 = vst [vmem:[%s177 + $0x1a0] sm:$0xff] %v1636
      %1701 = vst [vmem:[%s177 + $0x1a8] sm:$0xff] %v1637
      %1702 = vst [vmem:[%s177 + $0x1b0] sm:$0xff] %v1638
      %1703 = vst [vmem:[%s177 + $0x1b8] sm:$0xff] %v1639
      %1704 = vst [vmem:[%s177 + $0x1c0] sm:$0xff] %v1640
      %1705 = vst [vmem:[%s177 + $0x1c8] sm:$0xff] %v1641
      %1706 = vst [vmem:[%s177 + $0x1d0] sm:$0xff] %v1642
      %1707 = vst [vmem:[%s177 + $0x1d8] sm:$0xff] %v1643
      %1708 = vst [vmem:[%s177 + $0x1e0] sm:$0xff] %v1644
      %1709 = vst [vmem:[%s177 + $0x1e8] sm:$0xff] %v1645
      %1710 = vst [vmem:[%s177 + $0x1f0] sm:$0xff] %v1646
      %1711 = vst [vmem:[%s177 + $0x1f8] sm:$0xff] %v1647
      %s1712 = smul.u32 16, %s14
      %p1713 = scmp.lt.s32.totalorder %s1712, 31
      %s1714 = scalar_select %p1713, %s1712, 31
      %s1715 = smul.addr %s1714, 4
      %s1716 = smul.addr %s1715, 8
      %s1717 = scalar_lea.vmem %s3, %s1716
      // Predicated region
      $region33: #{conv3d_bn_relu_ndhwc.1} parent=31 // pred_check
        %p1718 = pneg %p100
      $region34: #{conv3d_bn_relu_ndhwc.1} parent=31 // pred_check_branch
        %1720 = sbr.rel (%p1718) target = $region36
      $region35: #{conv3d_bn_relu_ndhwc.1} parent=31 // pred_region
        %s1721 = smul.u32 16, %s14
      $region36: #{conv3d_bn_relu_ndhwc.1} parent=31 // pred_fallthru
        _
    $region32: #{conv3d_bn_relu_ndhwc.1} parent=5 // pred_fallthru
      _
    %p1722 = scmp.le.s32.totalorder 2, %s9
    // Predicated region
    $region37: #{conv3d_bn_relu_ndhwc.1} parent=5 // pred_check
      %p1723 = pneg %p1722
    $region38: #{conv3d_bn_relu_ndhwc.1} parent=5 // pred_check_branch
      %1725 = sbr.rel (%p1723) target = $region40
    $region39: #{conv3d_bn_relu_ndhwc.1} parent=5 // pred_region
      %s1726 = ssub.s32 %s9, 2
      // Predicated region
      $region41: #{conv3d_bn_relu_ndhwc.1} parent=39 // pred_check
        %p1727 = pneg %p106
      $region42: #{conv3d_bn_relu_ndhwc.1} parent=39 // pred_check_branch
        %1729 = sbr.rel (%p1727) target = $region44
      $region43: #{conv3d_bn_relu_ndhwc.1} parent=39 // pred_region
        %s1730 = smul.u32 16, %s15
        %p1731 = scmp.lt.s32.totalorder %s1730, 31
        %s1732 = scalar_select %p1731, %s1730, 31
        %s1733 = smul.addr %s1732, 4
        %s1734 = smul.addr %s1733, 8
        %s1735 = scalar_lea.vmem %s3, %s1734
      $region44: #{conv3d_bn_relu_ndhwc.1} parent=39 // pred_fallthru
        _
    $region40: #{conv3d_bn_relu_ndhwc.1} parent=5 // pred_fallthru
      _
  $region6: #{conv3d_bn_relu_ndhwc.1} parent=0 // loop_footer
    %s13 = sadd.s32 1, %s9
  $region7: #{conv3d_bn_relu_ndhwc.1} parent=0 // loop_footer_branch
    %8 = sbr.rel target = $region3
  $region8: #{conv3d_bn_relu_ndhwc.1} parent=0 // loop_exit
    _

</llo_original>
